<compile_context>
chip_gen: v5e
topology: v5e:2x2
jax: 0.10.0
libtpu: 0.0.40
codegen_flags: <defaults>
</compile_context>

<pallas_src>
import jax
import jax.numpy as jnp
from jax.experimental import pallas as pl
from jax.experimental.pallas import tpu as pltpu

EPS = 1e-5      # PyTorch BatchNorm2d default eps
LANES = 128


# ------------------------------- Pallas kernel -------------------------------
def cbh_kernel(x_ref, w_ref, b_ref, o_ref, slab_ref):
    # x_ref:    (H, W, Cin)        full image of one batch element, f32
    # w_ref:    (9, Cin, CP)       BN-folded weights, tap-major (kh*3+kw), CP=128
    # b_ref:    (1, Cout)          BN-folded bias, f32
    # o_ref:    (RT, W, Cout)      one strip of RT output rows, f32
    # slab_ref: (RT+2, W+2, Cin)   zero-padded halo slab (VMEM scratch)
    H, W, Cin = x_ref.shape
    RT, _, Cout = o_ref.shape
    s = pl.program_id(1)
    row0 = s * RT

    # --- Build the zero-padded halo slab for this strip -----------------------
    # One contiguous (RT)-row slab store; top/bottom halo rows only for interior
    # strips (pl.when).  Border rows/cols stay exactly zero -> pad=1 semantics.
    slab_ref[...] = jnp.zeros(slab_ref.shape, slab_ref.dtype)
    slab_ref[1:RT + 1, 1:W + 1, :] = x_ref[pl.ds(row0, RT), :, :]

    @pl.when(s > 0)
    def _():
        slab_ref[0:1, 1:W + 1, :] = x_ref[pl.ds(row0 - 1, 1), :, :]

    @pl.when(s < pl.num_programs(1) - 1)
    def _():
        slab_ref[RT + 1:RT + 2, 1:W + 1, :] = x_ref[pl.ds(row0 + RT, 1), :, :]

    # --- 9 accumulating MXU matmuls (one per conv tap) -------------------------
    # Each tap is a shifted slice of the VMEM slab; no lane-axis concatenation,
    # no im2col patch materialisation.  f32 operands, f32 accumulation.
    acc = jnp.zeros((RT * W, w_ref.shape[-1]), jnp.float32)
    for k in range(9):                                   # static 9-tap unroll
        kh, kw = divmod(k, 3)
        tap = slab_ref[kh:kh + RT, kw:kw + W, :].reshape(RT * W, Cin)
        acc = acc + jnp.dot(tap, w_ref[k], preferred_element_type=jnp.float32)

    # Drop the lane padding before the store, add bias, hardswish, single store.
    y = acc[:, :Cout] + b_ref[...]
    y = y * jnp.clip(y + 3.0, 0.0, 6.0) * (1.0 / 6.0)    # hardswish
    o_ref[...] = y.reshape(RT, W, Cout).astype(o_ref.dtype)


# --------------------------------- wrapper -----------------------------------
def cbh_pallas_forward(x_nchw, w_oihw, gamma, beta, mean, var, *, row_tile=None):
    """Forward pass of CBH (3x3 conv, stride=1, groups=1) on TPU via Pallas."""
    N, Cin, H, W = x_nchw.shape
    Cout, Cin_w, KH, KW = w_oihw.shape
    assert Cin_w == Cin and KH == 3 and KW == 3, "kernel implements 3x3, groups=1"
    # TODO(synk): stride > 1 and groups > 1 CBH configurations are not
    # implemented in the Pallas path (this instance uses stride=1, groups=1).

    if row_tile is None:
        row_tile = H                      # whole image per grid step at small H
    assert H % row_tile == 0
    n_strips = H // row_tile

    # Fold eval-mode BatchNorm into the conv:
    #   w' = w * gamma / sqrt(var + eps),  b' = beta - mean * gamma / sqrt(var + eps)
    scale = gamma / jnp.sqrt(var + EPS)                               # (Cout,)
    w_fused = w_oihw * scale[:, None, None, None]
    b_fused = beta - mean * scale

    # (O,I,kh,kw) -> (kh,kw,I,O) -> (9, Cin, Cout); pad Cout to 128 MXU lanes.
    cp = max(LANES, ((Cout + LANES - 1) // LANES) * LANES)
    assert Cout <= cp
    w_mat = jnp.transpose(w_fused, (2, 3, 1, 0)).reshape(KH * KW, Cin, Cout)
    w_mat = jnp.pad(w_mat, ((0, 0), (0, 0), (0, cp - Cout))).astype(jnp.float32)
    b_vec = b_fused.reshape(1, Cout).astype(jnp.float32)

    # Module contract is NCHW; compute in NHWC (channels on lanes).  This is the
    # only layout pass on the (tiny, un-inflated) activation.
    x_nhwc = jnp.transpose(x_nchw, (0, 2, 3, 1))

    cost = pl.CostEstimate(
        flops=2 * N * H * W * 9 * Cin * Cout,
        transcendentals=0,
        bytes_accessed=(N * H * W * Cin * 4 + 9 * Cin * cp * 4 + Cout * 4
                        + N * H * W * Cout * 4))

    # NOTE: the input spec stages the full (H, W, Cin) image per batch element;
    # fine here (4 KiB) -- for production H*W*Cin switch to per-strip windows
    # (manual async copy) to stay inside v7x's 64 MiB VMEM.
    out = pl.pallas_call(
        cbh_kernel,
        grid=(N, n_strips),
        in_specs=[
            pl.BlockSpec((None, H, W, Cin), lambda n, s: (n, 0, 0, 0)),
            pl.BlockSpec((KH * KW, Cin, cp), lambda n, s: (0, 0, 0)),
            pl.BlockSpec((1, Cout), lambda n, s: (0, 0)),
        ],
        out_specs=pl.BlockSpec((None, row_tile, W, Cout), lambda n, s: (n, s, 0, 0)),
        out_shape=jax.ShapeDtypeStruct((N, H, W, Cout), jnp.float32),
        scratch_shapes=[pltpu.VMEM((row_tile + 2, W + 2, Cin), jnp.float32)],
        compiler_params=pltpu.CompilerParams(
            dimension_semantics=("parallel", "parallel")),
        cost_estimate=cost,
    )(x_nhwc, w_mat, b_vec)

    return jnp.transpose(out, (0, 3, 1, 2))              # NHWC -> NCHW (module contract)


# ----------------------------- pure-JAX reference ----------------------------
def ref_forward(x, w, gamma, beta, mean, var):
    y = jax.lax.conv_general_dilated(
        x, w, window_strides=(1, 1), padding=[(1, 1), (1, 1)],
        dimension_numbers=("NCHW", "OIHW", "NCHW"))
    inv = 1.0 / jnp.sqrt(var + EPS)
    y = ((y - mean[None, :, None, None]) * (gamma * inv)[None, :, None, None]
         + beta[None, :, None, None])
    return y * jnp.clip(y + 3.0, 0.0, 6.0) / 6.0          # hardswish


def make_params(key, in_ch, out_ch, k=3):
    ks = jax.random.split(key, 5)
    w = jax.random.normal(ks[0], (out_ch, in_ch, k, k), jnp.float32) * 0.1
    gamma = 1.0 + 0.1 * jax.random.normal(ks[1], (out_ch,), jnp.float32)
    beta = 0.1 * jax.random.normal(ks[2], (out_ch,), jnp.float32)
    mean = 0.1 * jax.random.normal(ks[3], (out_ch,), jnp.float32)
    var = 0.5 + jax.random.uniform(ks[4], (out_ch,), jnp.float32)
    return w, gamma, beta, mean, var


# ------------------------------------ main ------------------------------------
if __name__ == "__main__":
    key = jax.random.PRNGKey(0)
    k_x, k_p = jax.random.split(key)

    N, Cin, H, W = 2, 4, 16, 16            # CBH(num_channels=4, num_filters=8, 3, 1)
    Cout = 8
    x = jax.random.normal(k_x, (N, Cin, H, W), jnp.float32)
    w, gamma, beta, mean, var = make_params(k_p, Cin, Cout)

    out = jax.block_until_ready(cbh_pallas_forward(x, w, gamma, beta, mean, var))
    ref = jax.block_until_ready(ref_forward(x, w, gamma, beta, mean, var))

    assert out.shape == (N, Cout, H, W)
    # MXU default precision rounds f32 operands; both paths see similar rounding.
    max_err = float(jnp.max(jnp.abs(out - ref)))
    assert max_err < 2e-2, f"mismatch vs reference: {max_err}"
    print("KERNEL_OK")
</pallas_src>

<mosaic_0001>
module attributes {stable_mosaic.version = 11 : i64} {
  func.func @cbh_kernel(%arg0: i32, %arg1: i32, %arg2: memref<1x16x16x4xf32, #tpu.memory_space<vmem>>, %arg3: memref<9x4x128xf32, #tpu.memory_space<vmem>>, %arg4: memref<1x8xf32, #tpu.memory_space<vmem>>, %arg5: memref<1x16x16x8xf32, #tpu.memory_space<vmem>>, %arg6: memref<18x18x4xf32, #tpu.memory_space<vmem>>) attributes {dimension_semantics = [#tpu.dimension_semantics<parallel>, #tpu.dimension_semantics<parallel>], iteration_bounds = array<i64: 2, 1>, scalar_prefetch = 0 : i64, scratch_operands = 1 : i64, tpu.core_type = #tpu.core_type<tc>, window_params = [{transform_indices = @transform_0, window_bounds = array<i64: 1, 16, 16, 4>}, {pipeline_mode = #tpu.pipeline_mode<synchronous>, transform_indices = @transform_1, window_bounds = array<i64: 9, 4, 128>}, {pipeline_mode = #tpu.pipeline_mode<synchronous>, transform_indices = @transform_2, window_bounds = array<i64: 1, 8>}, {transform_indices = @transform_3, window_bounds = array<i64: 1, 16, 16, 8>}]} {
    %c16_i32 = arith.constant 16 : i32
    %0 = arith.muli %arg1, %c16_i32 : i32
    %cst = arith.constant 0.000000e+00 : f32
    %1 = vector.broadcast %cst : f32 to vector<18x18x4xf32>
    %c0 = arith.constant 0 : index
    %c0_0 = arith.constant 0 : index
    %c0_1 = arith.constant 0 : index
    %2 = vector.load %arg6[%c0, %c0_0, %c0_1] : memref<18x18x4xf32, #tpu.memory_space<vmem>>, vector<18x18x4xf32>
    tpu.vector_store %arg6[%c0, %c0_0, %c0_1], %1 {strides = array<i32>} : memref<18x18x4xf32, #tpu.memory_space<vmem>>, vector<18x18x4xf32>,
    %c0_2 = arith.constant 0 : index
    %3 = arith.index_cast %0 : i32 to index
    %c0_3 = arith.constant 0 : index
    %c0_4 = arith.constant 0 : index
    %4 = vector.load %arg2[%c0_2, %3, %c0_3, %c0_4] : memref<1x16x16x4xf32, #tpu.memory_space<vmem>>, vector<1x16x16x4xf32>
    %5 = vector.shape_cast %4 : vector<1x16x16x4xf32> to vector<16x16x4xf32>
    %c1 = arith.constant 1 : index
    %c1_5 = arith.constant 1 : index
    %c0_6 = arith.constant 0 : index
    %6 = vector.load %arg6[%c1, %c1_5, %c0_6] : memref<18x18x4xf32, #tpu.memory_space<vmem>>, vector<16x16x4xf32>
    tpu.vector_store %arg6[%c1, %c1_5, %c0_6], %5 {strides = array<i32>} : memref<18x18x4xf32, #tpu.memory_space<vmem>>, vector<16x16x4xf32>,
    %c0_i32 = arith.constant 0 : i32
    %7 = arith.cmpi sgt, %arg1, %c0_i32 : i32
    %8 = arith.extui %7 : i1 to i32
    %c0_i32_7 = arith.constant 0 : i32
    %9 = arith.cmpi ne, %8, %c0_i32_7 : i32
    scf.if %9 {
      %c1_i32 = arith.constant 1 : i32
      %85 = arith.subi %0, %c1_i32 : i32
      %c0_77 = arith.constant 0 : index
      %86 = arith.index_cast %85 : i32 to index
      %c0_78 = arith.constant 0 : index
      %c0_79 = arith.constant 0 : index
      %87 = vector.load %arg2[%c0_77, %86, %c0_78, %c0_79] : memref<1x16x16x4xf32, #tpu.memory_space<vmem>>, vector<1x1x16x4xf32>
      %88 = vector.shape_cast %87 : vector<1x1x16x4xf32> to vector<1x16x4xf32>
      %c0_80 = arith.constant 0 : index
      %c1_81 = arith.constant 1 : index
      %c0_82 = arith.constant 0 : index
      %89 = vector.load %arg6[%c0_80, %c1_81, %c0_82] : memref<18x18x4xf32, #tpu.memory_space<vmem>>, vector<1x16x4xf32>
      tpu.vector_store %arg6[%c0_80, %c1_81, %c0_82], %88 {strides = array<i32>} : memref<18x18x4xf32, #tpu.memory_space<vmem>>, vector<1x16x4xf32>,
    } else {
    }
    %c0_i32_8 = arith.constant 0 : i32
    %10 = arith.cmpi slt, %arg1, %c0_i32_8 : i32
    %11 = arith.extui %10 : i1 to i32
    %c0_i32_9 = arith.constant 0 : i32
    %12 = arith.cmpi ne, %11, %c0_i32_9 : i32
    scf.if %12 {
      %c16_i32_77 = arith.constant 16 : i32
      %85 = arith.addi %0, %c16_i32_77 : i32
      %c0_78 = arith.constant 0 : index
      %86 = arith.index_cast %85 : i32 to index
      %c0_79 = arith.constant 0 : index
      %c0_80 = arith.constant 0 : index
      %87 = vector.load %arg2[%c0_78, %86, %c0_79, %c0_80] : memref<1x16x16x4xf32, #tpu.memory_space<vmem>>, vector<1x1x16x4xf32>
      %88 = vector.shape_cast %87 : vector<1x1x16x4xf32> to vector<1x16x4xf32>
      %c17 = arith.constant 17 : index
      %c1_81 = arith.constant 1 : index
      %c0_82 = arith.constant 0 : index
      %89 = vector.load %arg6[%c17, %c1_81, %c0_82] : memref<18x18x4xf32, #tpu.memory_space<vmem>>, vector<1x16x4xf32>
      tpu.vector_store %arg6[%c17, %c1_81, %c0_82], %88 {strides = array<i32>} : memref<18x18x4xf32, #tpu.memory_space<vmem>>, vector<1x16x4xf32>,
    } else {
    }
    %cst_10 = arith.constant 0.000000e+00 : f32
    %13 = vector.broadcast %cst_10 : f32 to vector<256x128xf32>
    %c0_11 = arith.constant 0 : index
    %c0_12 = arith.constant 0 : index
    %c0_13 = arith.constant 0 : index
    %14 = vector.load %arg6[%c0_11, %c0_12, %c0_13] : memref<18x18x4xf32, #tpu.memory_space<vmem>>, vector<16x16x4xf32>
    %15 = vector.shape_cast %14 : vector<16x16x4xf32> to vector<256x4xf32>
    %c0_14 = arith.constant 0 : index
    %c0_15 = arith.constant 0 : index
    %c0_16 = arith.constant 0 : index
    %16 = vector.load %arg3[%c0_14, %c0_15, %c0_16] : memref<9x4x128xf32, #tpu.memory_space<vmem>>, vector<1x4x128xf32>
    %17 = vector.shape_cast %16 : vector<1x4x128xf32> to vector<4x128xf32>
    %cst_17 = arith.constant dense<0.000000e+00> : vector<256x128xf32>
    %18 = tpu.matmul %15, %17, %cst_17 {dimension_numbers = #tpu.dot_dimension_numbers<[1], [0], [0], [1], [0, 0, 1, 1], [], []>} : vector<256x4xf32>, vector<4x128xf32>, vector<256x128xf32> -> vector<256x128xf32>
    %19 = arith.addf %13, %18 : vector<256x128xf32>
    %c0_18 = arith.constant 0 : index
    %c1_19 = arith.constant 1 : index
    %c0_20 = arith.constant 0 : index
    %20 = vector.load %arg6[%c0_18, %c1_19, %c0_20] : memref<18x18x4xf32, #tpu.memory_space<vmem>>, vector<16x16x4xf32>
    %21 = vector.shape_cast %20 : vector<16x16x4xf32> to vector<256x4xf32>
    %c1_21 = arith.constant 1 : index
    %c0_22 = arith.constant 0 : index
    %c0_23 = arith.constant 0 : index
    %22 = vector.load %arg3[%c1_21, %c0_22, %c0_23] : memref<9x4x128xf32, #tpu.memory_space<vmem>>, vector<1x4x128xf32>
    %23 = vector.shape_cast %22 : vector<1x4x128xf32> to vector<4x128xf32>
    %cst_24 = arith.constant dense<0.000000e+00> : vector<256x128xf32>
    %24 = tpu.matmul %21, %23, %cst_24 {dimension_numbers = #tpu.dot_dimension_numbers<[1], [0], [0], [1], [0, 0, 1, 1], [], []>} : vector<256x4xf32>, vector<4x128xf32>, vector<256x128xf32> -> vector<256x128xf32>
    %25 = arith.addf %19, %24 : vector<256x128xf32>
    %c0_25 = arith.constant 0 : index
    %c2 = arith.constant 2 : index
    %c0_26 = arith.constant 0 : index
    %26 = vector.load %arg6[%c0_25, %c2, %c0_26] : memref<18x18x4xf32, #tpu.memory_space<vmem>>, vector<16x16x4xf32>
    %27 = vector.shape_cast %26 : vector<16x16x4xf32> to vector<256x4xf32>
    %c2_27 = arith.constant 2 : index
    %c0_28 = arith.constant 0 : index
    %c0_29 = arith.constant 0 : index
    %28 = vector.load %arg3[%c2_27, %c0_28, %c0_29] : memref<9x4x128xf32, #tpu.memory_space<vmem>>, vector<1x4x128xf32>
    %29 = vector.shape_cast %28 : vector<1x4x128xf32> to vector<4x128xf32>
    %cst_30 = arith.constant dense<0.000000e+00> : vector<256x128xf32>
    %30 = tpu.matmul %27, %29, %cst_30 {dimension_numbers = #tpu.dot_dimension_numbers<[1], [0], [0], [1], [0, 0, 1, 1], [], []>} : vector<256x4xf32>, vector<4x128xf32>, vector<256x128xf32> -> vector<256x128xf32>
    %31 = arith.addf %25, %30 : vector<256x128xf32>
    %c1_31 = arith.constant 1 : index
    %c0_32 = arith.constant 0 : index
    %c0_33 = arith.constant 0 : index
    %32 = vector.load %arg6[%c1_31, %c0_32, %c0_33] : memref<18x18x4xf32, #tpu.memory_space<vmem>>, vector<16x16x4xf32>
    %33 = vector.shape_cast %32 : vector<16x16x4xf32> to vector<256x4xf32>
    %c3 = arith.constant 3 : index
    %c0_34 = arith.constant 0 : index
    %c0_35 = arith.constant 0 : index
    %34 = vector.load %arg3[%c3, %c0_34, %c0_35] : memref<9x4x128xf32, #tpu.memory_space<vmem>>, vector<1x4x128xf32>
    %35 = vector.shape_cast %34 : vector<1x4x128xf32> to vector<4x128xf32>
    %cst_36 = arith.constant dense<0.000000e+00> : vector<256x128xf32>
    %36 = tpu.matmul %33, %35, %cst_36 {dimension_numbers = #tpu.dot_dimension_numbers<[1], [0], [0], [1], [0, 0, 1, 1], [], []>} : vector<256x4xf32>, vector<4x128xf32>, vector<256x128xf32> -> vector<256x128xf32>
    %37 = arith.addf %31, %36 : vector<256x128xf32>
    %c1_37 = arith.constant 1 : index
    %c1_38 = arith.constant 1 : index
    %c0_39 = arith.constant 0 : index
    %38 = vector.load %arg6[%c1_37, %c1_38, %c0_39] : memref<18x18x4xf32, #tpu.memory_space<vmem>>, vector<16x16x4xf32>
    %39 = vector.shape_cast %38 : vector<16x16x4xf32> to vector<256x4xf32>
    %c4 = arith.constant 4 : index
    %c0_40 = arith.constant 0 : index
    %c0_41 = arith.constant 0 : index
    %40 = vector.load %arg3[%c4, %c0_40, %c0_41] : memref<9x4x128xf32, #tpu.memory_space<vmem>>, vector<1x4x128xf32>
    %41 = vector.shape_cast %40 : vector<1x4x128xf32> to vector<4x128xf32>
    %cst_42 = arith.constant dense<0.000000e+00> : vector<256x128xf32>
    %42 = tpu.matmul %39, %41, %cst_42 {dimension_numbers = #tpu.dot_dimension_numbers<[1], [0], [0], [1], [0, 0, 1, 1], [], []>} : vector<256x4xf32>, vector<4x128xf32>, vector<256x128xf32> -> vector<256x128xf32>
    %43 = arith.addf %37, %42 : vector<256x128xf32>
    %c1_43 = arith.constant 1 : index
    %c2_44 = arith.constant 2 : index
    %c0_45 = arith.constant 0 : index
    %44 = vector.load %arg6[%c1_43, %c2_44, %c0_45] : memref<18x18x4xf32, #tpu.memory_space<vmem>>, vector<16x16x4xf32>
    %45 = vector.shape_cast %44 : vector<16x16x4xf32> to vector<256x4xf32>
    %c5 = arith.constant 5 : index
    %c0_46 = arith.constant 0 : index
    %c0_47 = arith.constant 0 : index
    %46 = vector.load %arg3[%c5, %c0_46, %c0_47] : memref<9x4x128xf32, #tpu.memory_space<vmem>>, vector<1x4x128xf32>
    %47 = vector.shape_cast %46 : vector<1x4x128xf32> to vector<4x128xf32>
    %cst_48 = arith.constant dense<0.000000e+00> : vector<256x128xf32>
    %48 = tpu.matmul %45, %47, %cst_48 {dimension_numbers = #tpu.dot_dimension_numbers<[1], [0], [0], [1], [0, 0, 1, 1], [], []>} : vector<256x4xf32>, vector<4x128xf32>, vector<256x128xf32> -> vector<256x128xf32>
    %49 = arith.addf %43, %48 : vector<256x128xf32>
    %c2_49 = arith.constant 2 : index
    %c0_50 = arith.constant 0 : index
    %c0_51 = arith.constant 0 : index
    %50 = vector.load %arg6[%c2_49, %c0_50, %c0_51] : memref<18x18x4xf32, #tpu.memory_space<vmem>>, vector<16x16x4xf32>
    %51 = vector.shape_cast %50 : vector<16x16x4xf32> to vector<256x4xf32>
    %c6 = arith.constant 6 : index
    %c0_52 = arith.constant 0 : index
    %c0_53 = arith.constant 0 : index
    %52 = vector.load %arg3[%c6, %c0_52, %c0_53] : memref<9x4x128xf32, #tpu.memory_space<vmem>>, vector<1x4x128xf32>
    %53 = vector.shape_cast %52 : vector<1x4x128xf32> to vector<4x128xf32>
    %cst_54 = arith.constant dense<0.000000e+00> : vector<256x128xf32>
    %54 = tpu.matmul %51, %53, %cst_54 {dimension_numbers = #tpu.dot_dimension_numbers<[1], [0], [0], [1], [0, 0, 1, 1], [], []>} : vector<256x4xf32>, vector<4x128xf32>, vector<256x128xf32> -> vector<256x128xf32>
    %55 = arith.addf %49, %54 : vector<256x128xf32>
    %c2_55 = arith.constant 2 : index
    %c1_56 = arith.constant 1 : index
    %c0_57 = arith.constant 0 : index
    %56 = vector.load %arg6[%c2_55, %c1_56, %c0_57] : memref<18x18x4xf32, #tpu.memory_space<vmem>>, vector<16x16x4xf32>
    %57 = vector.shape_cast %56 : vector<16x16x4xf32> to vector<256x4xf32>
    %c7 = arith.constant 7 : index
    %c0_58 = arith.constant 0 : index
    %c0_59 = arith.constant 0 : index
    %58 = vector.load %arg3[%c7, %c0_58, %c0_59] : memref<9x4x128xf32, #tpu.memory_space<vmem>>, vector<1x4x128xf32>
    %59 = vector.shape_cast %58 : vector<1x4x128xf32> to vector<4x128xf32>
    %cst_60 = arith.constant dense<0.000000e+00> : vector<256x128xf32>
    %60 = tpu.matmul %57, %59, %cst_60 {dimension_numbers = #tpu.dot_dimension_numbers<[1], [0], [0], [1], [0, 0, 1, 1], [], []>} : vector<256x4xf32>, vector<4x128xf32>, vector<256x128xf32> -> vector<256x128xf32>
    %61 = arith.addf %55, %60 : vector<256x128xf32>
    %c2_61 = arith.constant 2 : index
    %c2_62 = arith.constant 2 : index
    %c0_63 = arith.constant 0 : index
    %62 = vector.load %arg6[%c2_61, %c2_62, %c0_63] : memref<18x18x4xf32, #tpu.memory_space<vmem>>, vector<16x16x4xf32>
    %63 = vector.shape_cast %62 : vector<16x16x4xf32> to vector<256x4xf32>
    %c8 = arith.constant 8 : index
    %c0_64 = arith.constant 0 : index
    %c0_65 = arith.constant 0 : index
    %64 = vector.load %arg3[%c8, %c0_64, %c0_65] : memref<9x4x128xf32, #tpu.memory_space<vmem>>, vector<1x4x128xf32>
    %65 = vector.shape_cast %64 : vector<1x4x128xf32> to vector<4x128xf32>
    %cst_66 = arith.constant dense<0.000000e+00> : vector<256x128xf32>
    %66 = tpu.matmul %63, %65, %cst_66 {dimension_numbers = #tpu.dot_dimension_numbers<[1], [0], [0], [1], [0, 0, 1, 1], [], []>} : vector<256x4xf32>, vector<4x128xf32>, vector<256x128xf32> -> vector<256x128xf32>
    %67 = arith.addf %61, %66 : vector<256x128xf32>
    %68 = vector.extract_strided_slice %67 {offsets = [0, 0], sizes = [256, 8], strides = [1, 1]} : vector<256x128xf32> to vector<256x8xf32>
    %c0_67 = arith.constant 0 : index
    %c0_68 = arith.constant 0 : index
    %69 = vector.load %arg4[%c0_67, %c0_68] : memref<1x8xf32, #tpu.memory_space<vmem>>, vector<1x8xf32>
    %70 = vector.broadcast %69 : vector<1x8xf32> to vector<256x8xf32>
    %71 = arith.addf %68, %70 : vector<256x8xf32>
    %cst_69 = arith.constant 3.000000e+00 : f32
    %72 = vector.broadcast %cst_69 : f32 to vector<256x8xf32>
    %73 = arith.addf %71, %72 : vector<256x8xf32>
    %cst_70 = arith.constant 0.000000e+00 : f32
    %cst_71 = arith.constant 6.000000e+00 : f32
    %74 = vector.broadcast %cst_70 : f32 to vector<256x8xf32>
    %75 = arith.maximumf %74, %73 : vector<256x8xf32>
    %76 = vector.broadcast %cst_71 : f32 to vector<256x8xf32>
    %77 = arith.minimumf %76, %75 : vector<256x8xf32>
    %78 = arith.mulf %71, %77 : vector<256x8xf32>
    %cst_72 = arith.constant 0.166666672 : f32
    %79 = vector.broadcast %cst_72 : f32 to vector<256x8xf32>
    %80 = arith.mulf %78, %79 : vector<256x8xf32>
    %81 = vector.shape_cast %80 : vector<256x8xf32> to vector<16x16x8xf32>
    %c0_73 = arith.constant 0 : index
    %c0_74 = arith.constant 0 : index
    %c0_75 = arith.constant 0 : index
    %c0_76 = arith.constant 0 : index
    %82 = vector.load %arg5[%c0_73, %c0_74, %c0_75, %c0_76] : memref<1x16x16x8xf32, #tpu.memory_space<vmem>>, vector<1x16x16x8xf32>
    %83 = vector.shape_cast %82 : vector<1x16x16x8xf32> to vector<16x16x8xf32>
    %84 = vector.shape_cast %81 : vector<16x16x8xf32> to vector<1x16x16x8xf32>
    tpu.vector_store %arg5[%c0_73, %c0_74, %c0_75, %c0_76], %84 {strides = array<i32>} : memref<1x16x16x8xf32, #tpu.memory_space<vmem>>, vector<1x16x16x8xf32>,
    return
  }
  func.func @transform_0(%arg0: i32, %arg1: i32) -> (i32, i32, i32, i32) {
    %c0_i32 = arith.constant 0 : i32
    %c0_i32_0 = arith.constant 0 : i32
    %c0_i32_1 = arith.constant 0 : i32
    %c0_i32_2 = arith.constant 0 : i32
    return %arg0, %c0_i32, %c0_i32_0, %c0_i32_1 : i32, i32, i32, i32
  }
  func.func @transform_1(%arg0: i32, %arg1: i32) -> (i32, i32, i32) {
    %c0_i32 = arith.constant 0 : i32
    %c0_i32_0 = arith.constant 0 : i32
    %c0_i32_1 = arith.constant 0 : i32
    %c0_i32_2 = arith.constant 0 : i32
    return %c0_i32, %c0_i32_0, %c0_i32_1 : i32, i32, i32
  }
  func.func @transform_2(%arg0: i32, %arg1: i32) -> (i32, i32) {
    %c0_i32 = arith.constant 0 : i32
    %c0_i32_0 = arith.constant 0 : i32
    %c0_i32_1 = arith.constant 0 : i32
    return %c0_i32, %c0_i32_0 : i32, i32
  }
  func.func @transform_3(%arg0: i32, %arg1: i32) -> (i32, i32, i32, i32) {
    %c0_i32 = arith.constant 0 : i32
    %c0_i32_0 = arith.constant 0 : i32
    %c0_i32_1 = arith.constant 0 : i32
    return %arg0, %arg1, %c0_i32, %c0_i32_0 : i32, i32, i32, i32
  }
}

</mosaic_0001>

<llo_original>
// kernel: tpu_custom_call.1
$region0: #{tpu_custom_call.1}
  #allocation0 [shape = 'u32[]', space=smem, size = 0x4, offset = 0x4, fixed_abs, tag = 'smem constant byte address 0x4 - core index']
  #allocation1 [shape = 'u32[72,128]{1,0:T(1,128)}', space=vmem, size = 0x9000, scoped, tag = 'internal scratch']
  #allocation2 [shape = 'f32[18,18,4]{2,1,0:T(8,128)}', space=vmem, size = 0x36000, scoped, tag = 'scratch operand']
  %s0 = inlined_call_operand.vmem [shape: f32[2,16,16,4], index: 0, kind: input, shape index: {}]
  %s1 = inlined_call_operand.vmem [shape: f32[9,4,128], index: 1, kind: input, shape index: {}]
  %s2 = inlined_call_operand.vmem [shape: f32[1,8], index: 2, kind: input, shape index: {}]
  %s3 = inlined_call_operand.vmem [shape: f32[2,16,16,8], index: 3, kind: output, shape index: {}]
  %s4 = sld [smem:[#allocation0]]
  $region53: #{tpu_custom_call.1} parent=0
    _
  %s6 = ssub.s32 1, %s4
  %s7 = scalar_select 0, %s6, %s4
  loop: start=0, step=1, limit=4
  $region2: #{tpu_custom_call.1} parent=0 // loop_pre_header
    _
  $region3: #{tpu_custom_call.1} parent=0 // loop_header
    %s9 = sphi 0, %s13
    %p10 = scmp.ge.s32.totalorder %s9, 4
    %s16 = sphi 0, %s28
    %s17 = sphi 0, %s24
    %s18 = sphi 0, %s16
    %s19 = sphi 0, %s17
    %s20 = sphi 0, %s18
    %s21 = sphi 0, %s19
    %s31 = sphi 0, %s33
    %s34 = sphi 0, %s31
    %s35 = sphi 0, %s34
    %s51 = sphi 0, %s35
    %s55 = sphi 0, %s55
    %s57 = sphi 0, %s55
    %s58 = sphi 0, %s57
    %s72 = sphi 0, %s58
    %s76 = sphi 0, %s76
    %s78 = sphi 0, %s76
    %s79 = sphi 0, %s78
    %s93 = sphi 0, %s79
    %s101 = sphi 0, %s103
    %s104 = sphi 0, %s101
    %s105 = sphi 0, %s104
    %s121 = sphi 0, %s105
  $region4: #{tpu_custom_call.1} parent=0 // loop_header_branch
    %12 = sbr.rel (%p10) target = $region8
  $region5: #{tpu_custom_call.1} parent=0 // loop_body
    %s14 = ssub.s32 %s9, 1
    %s15 = ssub.s32 %s9, 2
    %s22 = sadd.s32 1, %s17
    %p23 = scmp.ge.s32.totalorder %s22, 1
    %s24 = scalar_select %p23, 0, %s22
    %s25 = sadd.s32 1, %s16
    %s26 = scalar_select %p23, %s25, %s16
    %p27 = scmp.ge.s32.totalorder %s26, 2
    %s28 = scalar_select %p27, 0, %s26
    %s29 = ssub.s32 %s16, %s28
    %p30 = scmp.eq.s32.totalorder %s29, 0
    %s32 = sadd.s32 %s31, 1
    %s33 = scalar_select %p30, %s31, %s32
    %p36 = pneg %p30
    %p37 = scmp.eq.s32.totalorder %s9, 1
    %p38 = por %p36, %p37
    %p39 = scmp.ne.s32.totalorder %s31, %s34
    %p40 = scmp.eq.s32.totalorder %s9, 0
    %p41 = por %p39, %p40
    %p42 = scmp.ne.s32.totalorder %s31, %s34
    %p43 = scmp.eq.s32.totalorder %s14, 1
    %p44 = por %p42, %p43
    %p45 = scmp.ne.s32.totalorder %s34, %s35
    %p46 = scmp.eq.s32.totalorder %s14, 0
    %p47 = por %p45, %p46
    %p48 = scmp.ne.s32.totalorder %s34, %s35
    %p49 = scmp.eq.s32.totalorder %s15, 1
    %p50 = por %p48, %p49
    %p52 = scmp.ne.s32.totalorder %s35, %s51
    %p53 = scmp.eq.s32.totalorder %s15, 0
    %p54 = por %p52, %p53
    %s56 = sadd.s32 %s55, 1
    %p59 = scmp.eq.s32.totalorder %s9, 1
    %p60 = scmp.ne.s32.totalorder %s55, %s57
    %p61 = scmp.eq.s32.totalorder %s9, 0
    %p62 = por %p60, %p61
    %p63 = scmp.ne.s32.totalorder %s55, %s57
    %p64 = scmp.eq.s32.totalorder %s14, 1
    %p65 = por %p63, %p64
    %p66 = scmp.ne.s32.totalorder %s57, %s58
    %p67 = scmp.eq.s32.totalorder %s14, 0
    %p68 = por %p66, %p67
    %p69 = scmp.ne.s32.totalorder %s57, %s58
    %p70 = scmp.eq.s32.totalorder %s15, 1
    %p71 = por %p69, %p70
    %p73 = scmp.ne.s32.totalorder %s58, %s72
    %p74 = scmp.eq.s32.totalorder %s15, 0
    %p75 = por %p73, %p74
    %s77 = sadd.s32 %s76, 1
    %p80 = scmp.eq.s32.totalorder %s9, 1
    %p81 = scmp.ne.s32.totalorder %s76, %s78
    %p82 = scmp.eq.s32.totalorder %s9, 0
    %p83 = por %p81, %p82
    %p84 = scmp.ne.s32.totalorder %s76, %s78
    %p85 = scmp.eq.s32.totalorder %s14, 1
    %p86 = por %p84, %p85
    %p87 = scmp.ne.s32.totalorder %s78, %s79
    %p88 = scmp.eq.s32.totalorder %s14, 0
    %p89 = por %p87, %p88
    %p90 = scmp.ne.s32.totalorder %s78, %s79
    %p91 = scmp.eq.s32.totalorder %s15, 1
    %p92 = por %p90, %p91
    %p94 = scmp.ne.s32.totalorder %s79, %s93
    %p95 = scmp.eq.s32.totalorder %s15, 0
    %p96 = por %p94, %p95
    %s97 = ssub.s32 %s16, %s28
    %s98 = ssub.s32 %s17, %s24
    %s99 = sor.u32 %s97, %s98
    %p100 = scmp.eq.s32.totalorder %s99, 0
    %s102 = sadd.s32 %s101, 1
    %s103 = scalar_select %p100, %s101, %s102
    %p106 = pneg %p100
    %p107 = scmp.eq.s32.totalorder %s9, 1
    %p108 = por %p106, %p107
    %p109 = scmp.ne.s32.totalorder %s101, %s104
    %p110 = scmp.eq.s32.totalorder %s9, 0
    %p111 = por %p109, %p110
    %p112 = scmp.ne.s32.totalorder %s101, %s104
    %p113 = scmp.eq.s32.totalorder %s14, 1
    %p114 = por %p112, %p113
    %p115 = scmp.ne.s32.totalorder %s104, %s105
    %p116 = scmp.eq.s32.totalorder %s14, 0
    %p117 = por %p115, %p116
    %p118 = scmp.ne.s32.totalorder %s104, %s105
    %p119 = scmp.eq.s32.totalorder %s15, 1
    %p120 = por %p118, %p119
    %p122 = scmp.ne.s32.totalorder %s105, %s121
    %p123 = scmp.eq.s32.totalorder %s15, 0
    %p124 = por %p122, %p123
    %p125 = scmp.le.s32.totalorder 1, %s9
    %p126 = scmp.lt.s32.totalorder %s9, 3
    %p127 = pnand %p125, %p126
    %p128 = pneg %p127
    // Predicated region
    $region9: #{tpu_custom_call.1} parent=5 // pred_check
      _
    $region10: #{tpu_custom_call.1} parent=5 // pred_check_branch
      %130 = sbr.rel (%p127) target = $region12
    $region11: #{tpu_custom_call.1} parent=5 // pred_region
      %s131 = ssub.s32 %s9, 1
      // Predicated region
      $region13: #{tpu_custom_call.1} parent=11 // pred_check
        %p132 = pneg %p68
      $region14: #{tpu_custom_call.1} parent=11 // pred_check_branch
        %134 = sbr.rel (%p132) target = $region16
      $region15: #{tpu_custom_call.1} parent=11 // pred_region
        _
      $region16: #{tpu_custom_call.1} parent=11 // pred_fallthru
        _
      // Predicated region
      $region17: #{tpu_custom_call.1} parent=11 // pred_check
        %p135 = pneg %p89
      $region18: #{tpu_custom_call.1} parent=11 // pred_check_branch
        %137 = sbr.rel (%p135) target = $region20
      $region19: #{tpu_custom_call.1} parent=11 // pred_region
        _
      $region20: #{tpu_custom_call.1} parent=11 // pred_fallthru
        _
    $region12: #{tpu_custom_call.1} parent=5 // pred_fallthru
      _
    %p138 = scmp.lt.s32.totalorder %s9, 2
    // Predicated region
    $region21: #{tpu_custom_call.1} parent=5 // pred_check
      %p139 = pneg %p138
    $region22: #{tpu_custom_call.1} parent=5 // pred_check_branch
      %141 = sbr.rel (%p139) target = $region24
    $region23: #{tpu_custom_call.1} parent=5 // pred_region
      // Predicated region
      $region25: #{tpu_custom_call.1} parent=23 // pred_check
        %p142 = pneg %p41
      $region26: #{tpu_custom_call.1} parent=23 // pred_check_branch
        %144 = sbr.rel (%p142) target = $region28
      $region27: #{tpu_custom_call.1} parent=23 // pred_region
        %p145 = scmp.lt.s32.totalorder %s16, 1
        %s146 = scalar_select %p145, %s16, 1
        %s147 = smul.addr %s146, 32
        %s148 = smul.addr %s147, 8
        %s149 = scalar_lea.vmem %s0, %s148
      $region28: #{tpu_custom_call.1} parent=23 // pred_fallthru
        _
    $region24: #{tpu_custom_call.1} parent=5 // pred_fallthru
      _
    %p150 = scmp.le.s32.totalorder 1, %s9
    %p151 = scmp.lt.s32.totalorder %s9, 3
    %p152 = pnand %p150, %p151
    %p153 = pneg %p152
    // Predicated region
    $region29: #{tpu_custom_call.1} parent=5 // pred_check
      _
    $region30: #{tpu_custom_call.1} parent=5 // pred_check_branch
      %155 = sbr.rel (%p152) target = $region32
    $region31: #{tpu_custom_call.1} parent=5 // pred_region
      %s156 = ssub.s32 %s9, 1
      %p157 = scmp.lt.s32.totalorder %s18, 1
      %s158 = scalar_select %p157, %s18, 1
      %s159 = smul.addr %s158, 32
      %s160 = smul.addr %s159, 8
      %s161 = scalar_lea.vmem %s0, %s160
      %p162 = pneg %p47
      %p163 = pneg %p44
      %p164 = pneg %p68
      %p165 = pneg %p65
      %p166 = pneg %p89
      %p167 = pneg %p86
      %p168 = pneg %p117
      %p169 = pneg %p114
      %s170 = smul.u32 16, %s19
      %p171 = scmp.lt.s32.totalorder %s18, 1
      %s172 = scalar_select %p171, %s18, 1
      %p173 = scmp.lt.s32.totalorder %s170, 15
      %s174 = scalar_select %p173, %s170, 15
      %s175 = smul.addr %s174, 2
      %s176 = smul.addr %s172, 32
      %s177 = sadd.s32 %s175, %s176
      %s178 = smul.addr %s177, 8
      %s179 = scalar_lea.vmem %s3, %s178
      %p180 = scmp.lt.s32.totalorder %s18, 1
      %s181 = scalar_select %p180, %s18, 1
      %s182 = smul.addr %s181, 32
      %s183 = smul.addr %s182, 8
      %s184 = scalar_lea.vmem %s0, %s183
      %s185 = smul.u32 16, %s19
      %p186 = scmp.lt.s32.totalorder %s18, 1
      %s187 = scalar_select %p186, %s18, 1
      %p188 = scmp.lt.s32.totalorder %s185, 15
      %s189 = scalar_select %p188, %s185, 15
      %s190 = smul.addr %s189, 2
      %s191 = smul.addr %s187, 32
      %s192 = sadd.s32 %s190, %s191
      %s193 = smul.addr %s192, 8
      %s194 = scalar_lea.vmem %s3, %s193
      %s195 = smul.u32 16, %s19
      %s196 = smul.u32 %s19, 16
      %vm197 = vcmask 31744
      %198 = vst.msk [vmem:[#allocation2] sm:$0xff] %vm197, 0.0
      %199 = vst.msk [vmem:[#allocation2 + $0x8] sm:$0xff] %vm197, 0.0
      %vm200 = vcmask 25600
      %201 = vst.msk [vmem:[#allocation2 + $0x10] sm:$0x3] %vm200, 0.0
      %202 = vst.msk [vmem:[#allocation2 + $0x18] sm:$0xff] %vm197, 0.0
      %203 = vst.msk [vmem:[#allocation2 + $0x20] sm:$0xff] %vm197, 0.0
      %204 = vst.msk [vmem:[#allocation2 + $0x28] sm:$0x3] %vm200, 0.0
      %205 = vst.msk [vmem:[#allocation2 + $0x30] sm:$0xff] %vm197, 0.0
      %206 = vst.msk [vmem:[#allocation2 + $0x38] sm:$0xff] %vm197, 0.0
      %207 = vst.msk [vmem:[#allocation2 + $0x40] sm:$0x3] %vm200, 0.0
      %208 = vst.msk [vmem:[#allocation2 + $0x48] sm:$0xff] %vm197, 0.0
      %209 = vst.msk [vmem:[#allocation2 + $0x50] sm:$0xff] %vm197, 0.0
      %210 = vst.msk [vmem:[#allocation2 + $0x58] sm:$0x3] %vm200, 0.0
      %211 = vst.msk [vmem:[#allocation2 + $0x60] sm:$0xff] %vm197, 0.0
      %212 = vst.msk [vmem:[#allocation2 + $0x68] sm:$0xff] %vm197, 0.0
      %213 = vst.msk [vmem:[#allocation2 + $0x70] sm:$0x3] %vm200, 0.0
      %214 = vst.msk [vmem:[#allocation2 + $0x78] sm:$0xff] %vm197, 0.0
      %215 = vst.msk [vmem:[#allocation2 + $0x80] sm:$0xff] %vm197, 0.0
      %216 = vst.msk [vmem:[#allocation2 + $0x88] sm:$0x3] %vm200, 0.0
      %217 = vst.msk [vmem:[#allocation2 + $0x90] sm:$0xff] %vm197, 0.0
      %218 = vst.msk [vmem:[#allocation2 + $0x98] sm:$0xff] %vm197, 0.0
      %219 = vst.msk [vmem:[#allocation2 + $0xa0] sm:$0x3] %vm200, 0.0
      %220 = vst.msk [vmem:[#allocation2 + $0xa8] sm:$0xff] %vm197, 0.0
      %221 = vst.msk [vmem:[#allocation2 + $0xb0] sm:$0xff] %vm197, 0.0
      %222 = vst.msk [vmem:[#allocation2 + $0xb8] sm:$0x3] %vm200, 0.0
      %223 = vst.msk [vmem:[#allocation2 + $0xc0] sm:$0xff] %vm197, 0.0
      %224 = vst.msk [vmem:[#allocation2 + $0xc8] sm:$0xff] %vm197, 0.0
      %225 = vst.msk [vmem:[#allocation2 + $0xd0] sm:$0x3] %vm200, 0.0
      %226 = vst.msk [vmem:[#allocation2 + $0xd8] sm:$0xff] %vm197, 0.0
      %227 = vst.msk [vmem:[#allocation2 + $0xe0] sm:$0xff] %vm197, 0.0
      %228 = vst.msk [vmem:[#allocation2 + $0xe8] sm:$0x3] %vm200, 0.0
      %229 = vst.msk [vmem:[#allocation2 + $0xf0] sm:$0xff] %vm197, 0.0
      %230 = vst.msk [vmem:[#allocation2 + $0xf8] sm:$0xff] %vm197, 0.0
      %231 = vst.msk [vmem:[#allocation2 + $0x100] sm:$0x3] %vm200, 0.0
      %232 = vst.msk [vmem:[#allocation2 + $0x108] sm:$0xff] %vm197, 0.0
      %233 = vst.msk [vmem:[#allocation2 + $0x110] sm:$0xff] %vm197, 0.0
      %234 = vst.msk [vmem:[#allocation2 + $0x118] sm:$0x3] %vm200, 0.0
      %235 = vst.msk [vmem:[#allocation2 + $0x120] sm:$0xff] %vm197, 0.0
      %236 = vst.msk [vmem:[#allocation2 + $0x128] sm:$0xff] %vm197, 0.0
      %237 = vst.msk [vmem:[#allocation2 + $0x130] sm:$0x3] %vm200, 0.0
      %238 = vst.msk [vmem:[#allocation2 + $0x138] sm:$0xff] %vm197, 0.0
      %239 = vst.msk [vmem:[#allocation2 + $0x140] sm:$0xff] %vm197, 0.0
      %240 = vst.msk [vmem:[#allocation2 + $0x148] sm:$0x3] %vm200, 0.0
      %241 = vst.msk [vmem:[#allocation2 + $0x150] sm:$0xff] %vm197, 0.0
      %242 = vst.msk [vmem:[#allocation2 + $0x158] sm:$0xff] %vm197, 0.0
      %243 = vst.msk [vmem:[#allocation2 + $0x160] sm:$0x3] %vm200, 0.0
      %244 = vst.msk [vmem:[#allocation2 + $0x168] sm:$0xff] %vm197, 0.0
      %245 = vst.msk [vmem:[#allocation2 + $0x170] sm:$0xff] %vm197, 0.0
      %246 = vst.msk [vmem:[#allocation2 + $0x178] sm:$0x3] %vm200, 0.0
      %247 = vst.msk [vmem:[#allocation2 + $0x180] sm:$0xff] %vm197, 0.0
      %248 = vst.msk [vmem:[#allocation2 + $0x188] sm:$0xff] %vm197, 0.0
      %249 = vst.msk [vmem:[#allocation2 + $0x190] sm:$0x3] %vm200, 0.0
      %250 = vst.msk [vmem:[#allocation2 + $0x198] sm:$0xff] %vm197, 0.0
      %251 = vst.msk [vmem:[#allocation2 + $0x1a0] sm:$0xff] %vm197, 0.0
      %252 = vst.msk [vmem:[#allocation2 + $0x1a8] sm:$0x3] %vm200, 0.0
      %s253 = smul.u32 %s196, 16
      %s254 = scalar_lea.vmem %s184, %s253
      %v255 = vld [vmem:[%s254] sm:$0xff]
      %v256 = vld [vmem:[%s254 + $0x8] sm:$0xff]
      %v257 = vld [vmem:[%s254 + $0x10] sm:$0xff]
      %v258 = vld [vmem:[%s254 + $0x18] sm:$0xff]
      %v259 = vld [vmem:[%s254 + $0x20] sm:$0xff]
      %v260 = vld [vmem:[%s254 + $0x28] sm:$0xff]
      %v261 = vld [vmem:[%s254 + $0x30] sm:$0xff]
      %v262 = vld [vmem:[%s254 + $0x38] sm:$0xff]
      %v263 = vld [vmem:[%s254 + $0x40] sm:$0xff]
      %v264 = vld [vmem:[%s254 + $0x48] sm:$0xff]
      %v265 = vld [vmem:[%s254 + $0x50] sm:$0xff]
      %v266 = vld [vmem:[%s254 + $0x58] sm:$0xff]
      %v267 = vld [vmem:[%s254 + $0x60] sm:$0xff]
      %v268 = vld [vmem:[%s254 + $0x68] sm:$0xff]
      %v269 = vld [vmem:[%s254 + $0x70] sm:$0xff]
      %v270 = vld [vmem:[%s254 + $0x78] sm:$0xff]
      %v271 = vld [vmem:[%s254 + $0x80] sm:$0xff]
      %v272 = vld [vmem:[%s254 + $0x88] sm:$0xff]
      %v273 = vld [vmem:[%s254 + $0x90] sm:$0xff]
      %v274 = vld [vmem:[%s254 + $0x98] sm:$0xff]
      %v275 = vld [vmem:[%s254 + $0xa0] sm:$0xff]
      %v276 = vld [vmem:[%s254 + $0xa8] sm:$0xff]
      %v277 = vld [vmem:[%s254 + $0xb0] sm:$0xff]
      %v278 = vld [vmem:[%s254 + $0xb8] sm:$0xff]
      %v279 = vld [vmem:[%s254 + $0xc0] sm:$0xff]
      %v280 = vld [vmem:[%s254 + $0xc8] sm:$0xff]
      %v281 = vld [vmem:[%s254 + $0xd0] sm:$0xff]
      %v282 = vld [vmem:[%s254 + $0xd8] sm:$0xff]
      %v283 = vld [vmem:[%s254 + $0xe0] sm:$0xff]
      %v284 = vld [vmem:[%s254 + $0xe8] sm:$0xff]
      %v285 = vld [vmem:[%s254 + $0xf0] sm:$0xff]
      %v286 = vld [vmem:[%s254 + $0xf8] sm:$0xff]
      %s287 = scalar_lea.vmem [#allocation2], 24
      %288 = vst.msk [vmem:[%s287 + $0x1] sm:$0xff] %vm197, %v255
      %289 = vst.msk [vmem:[%s287 + $0x9] sm:$0xff] %vm197, %v256
      %290 = vst.msk [vmem:[%s287 + $0x19] sm:$0xff] %vm197, %v257
      %291 = vst.msk [vmem:[%s287 + $0x21] sm:$0xff] %vm197, %v258
      %292 = vst.msk [vmem:[%s287 + $0x31] sm:$0xff] %vm197, %v259
      %293 = vst.msk [vmem:[%s287 + $0x39] sm:$0xff] %vm197, %v260
      %294 = vst.msk [vmem:[%s287 + $0x49] sm:$0xff] %vm197, %v261
      %295 = vst.msk [vmem:[%s287 + $0x51] sm:$0xff] %vm197, %v262
      %296 = vst.msk [vmem:[%s287 + $0x61] sm:$0xff] %vm197, %v263
      %297 = vst.msk [vmem:[%s287 + $0x69] sm:$0xff] %vm197, %v264
      %298 = vst.msk [vmem:[%s287 + $0x79] sm:$0xff] %vm197, %v265
      %299 = vst.msk [vmem:[%s287 + $0x81] sm:$0xff] %vm197, %v266
      %300 = vst.msk [vmem:[%s287 + $0x91] sm:$0xff] %vm197, %v267
      %301 = vst.msk [vmem:[%s287 + $0x99] sm:$0xff] %vm197, %v268
      %302 = vst.msk [vmem:[%s287 + $0xa9] sm:$0xff] %vm197, %v269
      %303 = vst.msk [vmem:[%s287 + $0xb1] sm:$0xff] %vm197, %v270
      %304 = vst.msk [vmem:[%s287 + $0xc1] sm:$0xff] %vm197, %v271
      %305 = vst.msk [vmem:[%s287 + $0xc9] sm:$0xff] %vm197, %v272
      %306 = vst.msk [vmem:[%s287 + $0xd9] sm:$0xff] %vm197, %v273
      %307 = vst.msk [vmem:[%s287 + $0xe1] sm:$0xff] %vm197, %v274
      %308 = vst.msk [vmem:[%s287 + $0xf1] sm:$0xff] %vm197, %v275
      %309 = vst.msk [vmem:[%s287 + $0xf9] sm:$0xff] %vm197, %v276
      %310 = vst.msk [vmem:[%s287 + $0x109] sm:$0xff] %vm197, %v277
      %311 = vst.msk [vmem:[%s287 + $0x111] sm:$0xff] %vm197, %v278
      %312 = vst.msk [vmem:[%s287 + $0x121] sm:$0xff] %vm197, %v279
      %313 = vst.msk [vmem:[%s287 + $0x129] sm:$0xff] %vm197, %v280
      %314 = vst.msk [vmem:[%s287 + $0x139] sm:$0xff] %vm197, %v281
      %315 = vst.msk [vmem:[%s287 + $0x141] sm:$0xff] %vm197, %v282
      %316 = vst.msk [vmem:[%s287 + $0x151] sm:$0xff] %vm197, %v283
      %317 = vst.msk [vmem:[%s287 + $0x159] sm:$0xff] %vm197, %v284
      %318 = vst.msk [vmem:[%s287 + $0x169] sm:$0xff] %vm197, %v285
      %319 = vst.msk [vmem:[%s287 + $0x171] sm:$0xff] %vm197, %v286
      %p320 = scmp.gt.s32.totalorder %s19, 0
      // Predicated region
      $region33: #{tpu_custom_call.1} parent=31 // pred_check
        %p321 = pneg %p320
      $region34: #{tpu_custom_call.1} parent=31 // pred_check_branch
        %323 = sbr.rel (%p321) target = $region36
      $region35: #{tpu_custom_call.1} parent=31 // pred_region
        %s324 = ssub.s32 %s196, 1
        %s325 = smul.u32 %s324, 16
        %s326 = scalar_lea.vmem %s184, %s325
        %v327 = vld [vmem:[%s326] sm:$0xff]
        %v328 = vld [vmem:[%s326 + $0x8] sm:$0xff]
        %329 = vst.msk [vmem:[#allocation2 + $0x1] sm:$0xff] %vm197, %v327
        %330 = vst.msk [vmem:[#allocation2 + $0x9] sm:$0xff] %vm197, %v328
      $region36: #{tpu_custom_call.1} parent=31 // pred_fallthru
        _
      %p331 = scmp.lt.s32.totalorder %s19, 0
      // Predicated region
      $region37: #{tpu_custom_call.1} parent=31 // pred_check
        %p332 = pneg %p331
      $region38: #{tpu_custom_call.1} parent=31 // pred_check_branch
        %334 = sbr.rel (%p332) target = $region40
      $region39: #{tpu_custom_call.1} parent=31 // pred_region
        %s335 = sadd.s32 %s196, 16
        %s336 = smul.u32 %s335, 16
        %s337 = scalar_lea.vmem %s184, %s336
        %v338 = vld [vmem:[%s337] sm:$0xff]
        %v339 = vld [vmem:[%s337 + $0x8] sm:$0xff]
        %s340 = scalar_lea.vmem [#allocation2], 408
        %341 = vst.msk [vmem:[%s340 + $0x1] sm:$0xff] %vm197, %v338
        %342 = vst.msk [vmem:[%s340 + $0x9] sm:$0xff] %vm197, %v339
      $region40: #{tpu_custom_call.1} parent=31 // pred_fallthru
        _
      %v343 = vld [vmem:[#allocation2] sm:$0xff]
      %v344 = vld [vmem:[#allocation2 + $0x8] sm:$0xff]
      %v345 = vld [vmem:[#allocation2 + $0x18] sm:$0xff]
      %v346 = vld [vmem:[#allocation2 + $0x20] sm:$0xff]
      %v347 = vld [vmem:[#allocation2 + $0x30] sm:$0xff]
      %v348 = vld [vmem:[#allocation2 + $0x38] sm:$0xff]
      %v349 = vld [vmem:[#allocation2 + $0x48] sm:$0xff]
      %v350 = vld [vmem:[#allocation2 + $0x50] sm:$0xff]
      %v351 = vld [vmem:[#allocation2 + $0x60] sm:$0xff]
      %v352 = vld [vmem:[#allocation2 + $0x68] sm:$0xff]
      %v353 = vld [vmem:[#allocation2 + $0x78] sm:$0xff]
      %v354 = vld [vmem:[#allocation2 + $0x80] sm:$0xff]
      %v355 = vld [vmem:[#allocation2 + $0x90] sm:$0xff]
      %v356 = vld [vmem:[#allocation2 + $0x98] sm:$0xff]
      %v357 = vld [vmem:[#allocation2 + $0xa8] sm:$0xff]
      %v358 = vld [vmem:[#allocation2 + $0xb0] sm:$0xff]
      %v359 = vld [vmem:[#allocation2 + $0xc0] sm:$0xff]
      %v360 = vld [vmem:[#allocation2 + $0xc8] sm:$0xff]
      %v361 = vld [vmem:[#allocation2 + $0xd8] sm:$0xff]
      %v362 = vld [vmem:[#allocation2 + $0xe0] sm:$0xff]
      %v363 = vld [vmem:[#allocation2 + $0xf0] sm:$0xff]
      %v364 = vld [vmem:[#allocation2 + $0xf8] sm:$0xff]
      %v365 = vld [vmem:[#allocation2 + $0x108] sm:$0xff]
      %v366 = vld [vmem:[#allocation2 + $0x110] sm:$0xff]
      %v367 = vld [vmem:[#allocation2 + $0x120] sm:$0xff]
      %v368 = vld [vmem:[#allocation2 + $0x128] sm:$0xff]
      %v369 = vld [vmem:[#allocation2 + $0x138] sm:$0xff]
      %v370 = vld [vmem:[#allocation2 + $0x140] sm:$0xff]
      %v371 = vld [vmem:[#allocation2 + $0x150] sm:$0xff]
      %v372 = vld [vmem:[#allocation2 + $0x158] sm:$0xff]
      %v373 = vld [vmem:[#allocation2 + $0x168] sm:$0xff]
      %v374 = vld [vmem:[#allocation2 + $0x170] sm:$0xff]
      %v375 = vld [vmem:[%s1] sm:$0xf]
      %v376 = vld [vmem:[#allocation2 + $0x1] sm:$0xff]
      %v377 = vld [vmem:[#allocation2 + $0x9] sm:$0xff]
      %v378 = vld [vmem:[#allocation2 + $0x19] sm:$0xff]
      %v379 = vld [vmem:[#allocation2 + $0x21] sm:$0xff]
      %v380 = vld [vmem:[#allocation2 + $0x31] sm:$0xff]
      %v381 = vld [vmem:[#allocation2 + $0x39] sm:$0xff]
      %v382 = vld [vmem:[#allocation2 + $0x49] sm:$0xff]
      %v383 = vld [vmem:[#allocation2 + $0x51] sm:$0xff]
      %v384 = vld [vmem:[#allocation2 + $0x61] sm:$0xff]
      %v385 = vld [vmem:[#allocation2 + $0x69] sm:$0xff]
      %v386 = vld [vmem:[#allocation2 + $0x79] sm:$0xff]
      %v387 = vld [vmem:[#allocation2 + $0x81] sm:$0xff]
      %v388 = vld [vmem:[#allocation2 + $0x91] sm:$0xff]
      %v389 = vld [vmem:[#allocation2 + $0x99] sm:$0xff]
      %v390 = vld [vmem:[#allocation2 + $0xa9] sm:$0xff]
      %v391 = vld [vmem:[#allocation2 + $0xb1] sm:$0xff]
      %v392 = vld [vmem:[#allocation2 + $0xc1] sm:$0xff]
      %v393 = vld [vmem:[#allocation2 + $0xc9] sm:$0xff]
      %v394 = vld [vmem:[#allocation2 + $0xd9] sm:$0xff]
      %v395 = vld [vmem:[#allocation2 + $0xe1] sm:$0xff]
      %v396 = vld [vmem:[#allocation2 + $0xf1] sm:$0xff]
      %v397 = vld [vmem:[#allocation2 + $0xf9] sm:$0xff]
      %v398 = vld [vmem:[#allocation2 + $0x109] sm:$0xff]
      %v399 = vld [vmem:[#allocation2 + $0x111] sm:$0xff]
      %v400 = vld [vmem:[#allocation2 + $0x121] sm:$0xff]
      %v401 = vld [vmem:[#allocation2 + $0x129] sm:$0xff]
      %v402 = vld [vmem:[#allocation2 + $0x139] sm:$0xff]
      %v403 = vld [vmem:[#allocation2 + $0x141] sm:$0xff]
      %v404 = vld [vmem:[#allocation2 + $0x151] sm:$0xff]
      %v405 = vld [vmem:[#allocation2 + $0x159] sm:$0xff]
      %v406 = vld [vmem:[#allocation2 + $0x169] sm:$0xff]
      %v407 = vld [vmem:[#allocation2 + $0x171] sm:$0xff]
      %s408 = scalar_lea.vmem %s1, 4
      %v409 = vld [vmem:[%s408] sm:$0xf]
      %v411 = vsel %vm197, %v376, 0
      %v414 = vsel %vm197, %v377, 0
      %v417 = vsel %vm197, %v378, 0
      %v420 = vsel %vm197, %v379, 0
      %v423 = vsel %vm197, %v380, 0
      %v426 = vsel %vm197, %v381, 0
      %v429 = vsel %vm197, %v382, 0
      %v432 = vsel %vm197, %v383, 0
      %v435 = vsel %vm197, %v384, 0
      %v438 = vsel %vm197, %v385, 0
      %v441 = vsel %vm197, %v386, 0
      %v444 = vsel %vm197, %v387, 0
      %v447 = vsel %vm197, %v388, 0
      %v450 = vsel %vm197, %v389, 0
      %v453 = vsel %vm197, %v390, 0
      %v456 = vsel %vm197, %v391, 0
      %v459 = vsel %vm197, %v392, 0
      %v462 = vsel %vm197, %v393, 0
      %v465 = vsel %vm197, %v394, 0
      %v468 = vsel %vm197, %v395, 0
      %v471 = vsel %vm197, %v396, 0
      %v474 = vsel %vm197, %v397, 0
      %v477 = vsel %vm197, %v398, 0
      %v480 = vsel %vm197, %v399, 0
      %v483 = vsel %vm197, %v400, 0
      %v486 = vsel %vm197, %v401, 0
      %v489 = vsel %vm197, %v402, 0
      %v492 = vsel %vm197, %v403, 0
      %v495 = vsel %vm197, %v404, 0
      %v498 = vsel %vm197, %v405, 0
      %v501 = vsel %vm197, %v406, 0
      %v504 = vsel %vm197, %v407, 0
      %vm506 = vcmask 1043456
      %v508 = vsel %vm506, %v409, 0
      %510 = vmatpush.msra.mxu0 0.0
      %511 = vmatpush.msra.mxu0 0.0
      %512 = vmatpush.msra.mxu0 0.0
      %513 = vmatpush.msra.mxu0 0.0
      %514 = vmatpush.msra.mxu0 0.0
      %515 = vmatpush.msra.mxu0 0.0
      %516 = vmatpush.msra.mxu0 0.0
      %517 = vmatpush.msra.mxu0 0.0
      %518 = vmatpush.msra.mxu0 0.0
      %519 = vmatpush.msra.mxu0 0.0
      %520 = vmatpush.msra.mxu0 0.0
      %521 = vmatpush.msra.mxu0 0.0
      %522 = vmatpush.msra.mxu0 0.0
      %523 = vmatpush.msra.mxu0 0.0
      %524 = vmatpush.msra.mxu0 0.0
      %525 = vmatpush.msra.mxu0 %v508
      %526 = vmatmul.f32.gmra.mxu0 %v411
      %v527 = vpop.f32.mrf.mxu0
      %v528 = vadd.f32 0.0, %v527
      %529 = vmatmul.f32.gmra.mxu0 %v414
      %v530 = vpop.f32.mrf.mxu0
      %v531 = vadd.f32 0.0, %v530
      %532 = vmatmul.f32.gmra.mxu0 %v417
      %v533 = vpop.f32.mrf.mxu0
      %v534 = vadd.f32 0.0, %v533
      %535 = vmatmul.f32.gmra.mxu0 %v420
      %v536 = vpop.f32.mrf.mxu0
      %v537 = vadd.f32 0.0, %v536
      %538 = vmatmul.f32.gmra.mxu0 %v423
      %v539 = vpop.f32.mrf.mxu0
      %v540 = vadd.f32 0.0, %v539
      %541 = vmatmul.f32.gmra.mxu0 %v426
      %v542 = vpop.f32.mrf.mxu0
      %v543 = vadd.f32 0.0, %v542
      %544 = vmatmul.f32.gmra.mxu0 %v429
      %v545 = vpop.f32.mrf.mxu0
      %v546 = vadd.f32 0.0, %v545
      %547 = vmatmul.f32.gmra.mxu0 %v432
      %v548 = vpop.f32.mrf.mxu0
      %v549 = vadd.f32 0.0, %v548
      %550 = vmatmul.f32.gmra.mxu0 %v435
      %v551 = vpop.f32.mrf.mxu0
      %v552 = vadd.f32 0.0, %v551
      %553 = vmatmul.f32.gmra.mxu0 %v438
      %v554 = vpop.f32.mrf.mxu0
      %v555 = vadd.f32 0.0, %v554
      %556 = vmatmul.f32.gmra.mxu0 %v441
      %v557 = vpop.f32.mrf.mxu0
      %v558 = vadd.f32 0.0, %v557
      %559 = vmatmul.f32.gmra.mxu0 %v444
      %v560 = vpop.f32.mrf.mxu0
      %v561 = vadd.f32 0.0, %v560
      %562 = vmatmul.f32.gmra.mxu0 %v447
      %v563 = vpop.f32.mrf.mxu0
      %v564 = vadd.f32 0.0, %v563
      %565 = vmatmul.f32.gmra.mxu0 %v450
      %v566 = vpop.f32.mrf.mxu0
      %v567 = vadd.f32 0.0, %v566
      %568 = vmatmul.f32.gmra.mxu0 %v453
      %v569 = vpop.f32.mrf.mxu0
      %v570 = vadd.f32 0.0, %v569
      %571 = vmatmul.f32.gmra.mxu0 %v456
      %v572 = vpop.f32.mrf.mxu0
      %v573 = vadd.f32 0.0, %v572
      %574 = vmatmul.f32.gmra.mxu0 %v459
      %v575 = vpop.f32.mrf.mxu0
      %v576 = vadd.f32 0.0, %v575
      %577 = vmatmul.f32.gmra.mxu0 %v462
      %v578 = vpop.f32.mrf.mxu0
      %v579 = vadd.f32 0.0, %v578
      %580 = vmatmul.f32.gmra.mxu0 %v465
      %v581 = vpop.f32.mrf.mxu0
      %v582 = vadd.f32 0.0, %v581
      %583 = vmatmul.f32.gmra.mxu0 %v468
      %v584 = vpop.f32.mrf.mxu0
      %v585 = vadd.f32 0.0, %v584
      %586 = vmatmul.f32.gmra.mxu0 %v471
      %v587 = vpop.f32.mrf.mxu0
      %v588 = vadd.f32 0.0, %v587
      %589 = vmatmul.f32.gmra.mxu0 %v474
      %v590 = vpop.f32.mrf.mxu0
      %v591 = vadd.f32 0.0, %v590
      %592 = vmatmul.f32.gmra.mxu0 %v477
      %v593 = vpop.f32.mrf.mxu0
      %v594 = vadd.f32 0.0, %v593
      %595 = vmatmul.f32.gmra.mxu0 %v480
      %v596 = vpop.f32.mrf.mxu0
      %v597 = vadd.f32 0.0, %v596
      %598 = vmatmul.f32.gmra.mxu0 %v483
      %v599 = vpop.f32.mrf.mxu0
      %v600 = vadd.f32 0.0, %v599
      %601 = vmatmul.f32.gmra.mxu0 %v486
      %v602 = vpop.f32.mrf.mxu0
      %v603 = vadd.f32 0.0, %v602
      %604 = vmatmul.f32.gmra.mxu0 %v489
      %v605 = vpop.f32.mrf.mxu0
      %v606 = vadd.f32 0.0, %v605
      %607 = vmatmul.f32.gmra.mxu0 %v492
      %v608 = vpop.f32.mrf.mxu0
      %v609 = vadd.f32 0.0, %v608
      %610 = vmatmul.f32.gmra.mxu0 %v495
      %v611 = vpop.f32.mrf.mxu0
      %v612 = vadd.f32 0.0, %v611
      %613 = vmatmul.f32.gmra.mxu0 %v498
      %v614 = vpop.f32.mrf.mxu0
      %v615 = vadd.f32 0.0, %v614
      %616 = vmatmul.f32.gmra.mxu0 %v501
      %v617 = vpop.f32.mrf.mxu0
      %v618 = vadd.f32 0.0, %v617
      %619 = vmatmul.f32.gmra.mxu0 %v504
      %v620 = vpop.f32.mrf.mxu0
      %v621 = vadd.f32 0.0, %v620
      %622 = vdwg.mxu0
      %v624 = vsel %vm197, %v343, 0
      %v627 = vsel %vm197, %v344, 0
      %v630 = vsel %vm197, %v345, 0
      %v633 = vsel %vm197, %v346, 0
      %v636 = vsel %vm197, %v347, 0
      %v639 = vsel %vm197, %v348, 0
      %v642 = vsel %vm197, %v349, 0
      %v645 = vsel %vm197, %v350, 0
      %v648 = vsel %vm197, %v351, 0
      %v651 = vsel %vm197, %v352, 0
      %v654 = vsel %vm197, %v353, 0
      %v657 = vsel %vm197, %v354, 0
      %v660 = vsel %vm197, %v355, 0
      %v663 = vsel %vm197, %v356, 0
      %v666 = vsel %vm197, %v357, 0
      %v669 = vsel %vm197, %v358, 0
      %v672 = vsel %vm197, %v359, 0
      %v675 = vsel %vm197, %v360, 0
      %v678 = vsel %vm197, %v361, 0
      %v681 = vsel %vm197, %v362, 0
      %v684 = vsel %vm197, %v363, 0
      %v687 = vsel %vm197, %v364, 0
      %v690 = vsel %vm197, %v365, 0
      %v693 = vsel %vm197, %v366, 0
      %v696 = vsel %vm197, %v367, 0
      %v699 = vsel %vm197, %v368, 0
      %v702 = vsel %vm197, %v369, 0
      %v705 = vsel %vm197, %v370, 0
      %v708 = vsel %vm197, %v371, 0
      %v711 = vsel %vm197, %v372, 0
      %v714 = vsel %vm197, %v373, 0
      %v717 = vsel %vm197, %v374, 0
      %v720 = vsel %vm506, %v375, 0
      %722 = vmatpush.msra.mxu0 0.0
      %723 = vmatpush.msra.mxu0 0.0
      %724 = vmatpush.msra.mxu0 0.0
      %725 = vmatpush.msra.mxu0 0.0
      %726 = vmatpush.msra.mxu0 0.0
      %727 = vmatpush.msra.mxu0 0.0
      %728 = vmatpush.msra.mxu0 0.0
      %729 = vmatpush.msra.mxu0 0.0
      %730 = vmatpush.msra.mxu0 0.0
      %731 = vmatpush.msra.mxu0 0.0
      %732 = vmatpush.msra.mxu0 0.0
      %733 = vmatpush.msra.mxu0 0.0
      %734 = vmatpush.msra.mxu0 0.0
      %735 = vmatpush.msra.mxu0 0.0
      %736 = vmatpush.msra.mxu0 0.0
      %737 = vmatpush.msra.mxu0 %v720
      %738 = vmatmul.f32.gmra.mxu0 %v624
      %v739 = vpop.f32.mrf.mxu0
      %v740 = vadd.f32 %v528, %v739
      %741 = vmatmul.f32.gmra.mxu0 %v627
      %v742 = vpop.f32.mrf.mxu0
      %v743 = vadd.f32 %v531, %v742
      %744 = vmatmul.f32.gmra.mxu0 %v630
      %v745 = vpop.f32.mrf.mxu0
      %v746 = vadd.f32 %v534, %v745
      %747 = vmatmul.f32.gmra.mxu0 %v633
      %v748 = vpop.f32.mrf.mxu0
      %v749 = vadd.f32 %v537, %v748
      %750 = vmatmul.f32.gmra.mxu0 %v636
      %v751 = vpop.f32.mrf.mxu0
      %v752 = vadd.f32 %v540, %v751
      %753 = vmatmul.f32.gmra.mxu0 %v639
      %v754 = vpop.f32.mrf.mxu0
      %v755 = vadd.f32 %v543, %v754
      %756 = vmatmul.f32.gmra.mxu0 %v642
      %v757 = vpop.f32.mrf.mxu0
      %v758 = vadd.f32 %v546, %v757
      %759 = vmatmul.f32.gmra.mxu0 %v645
      %v760 = vpop.f32.mrf.mxu0
      %v761 = vadd.f32 %v549, %v760
      %762 = vmatmul.f32.gmra.mxu0 %v648
      %v763 = vpop.f32.mrf.mxu0
      %v764 = vadd.f32 %v552, %v763
      %765 = vmatmul.f32.gmra.mxu0 %v651
      %v766 = vpop.f32.mrf.mxu0
      %v767 = vadd.f32 %v555, %v766
      %768 = vmatmul.f32.gmra.mxu0 %v654
      %v769 = vpop.f32.mrf.mxu0
      %v770 = vadd.f32 %v558, %v769
      %771 = vmatmul.f32.gmra.mxu0 %v657
      %v772 = vpop.f32.mrf.mxu0
      %v773 = vadd.f32 %v561, %v772
      %774 = vmatmul.f32.gmra.mxu0 %v660
      %v775 = vpop.f32.mrf.mxu0
      %v776 = vadd.f32 %v564, %v775
      %777 = vmatmul.f32.gmra.mxu0 %v663
      %v778 = vpop.f32.mrf.mxu0
      %v779 = vadd.f32 %v567, %v778
      %780 = vmatmul.f32.gmra.mxu0 %v666
      %v781 = vpop.f32.mrf.mxu0
      %v782 = vadd.f32 %v570, %v781
      %783 = vmatmul.f32.gmra.mxu0 %v669
      %v784 = vpop.f32.mrf.mxu0
      %v785 = vadd.f32 %v573, %v784
      %786 = vmatmul.f32.gmra.mxu0 %v672
      %v787 = vpop.f32.mrf.mxu0
      %v788 = vadd.f32 %v576, %v787
      %789 = vmatmul.f32.gmra.mxu0 %v675
      %v790 = vpop.f32.mrf.mxu0
      %v791 = vadd.f32 %v579, %v790
      %792 = vmatmul.f32.gmra.mxu0 %v678
      %v793 = vpop.f32.mrf.mxu0
      %v794 = vadd.f32 %v582, %v793
      %795 = vmatmul.f32.gmra.mxu0 %v681
      %v796 = vpop.f32.mrf.mxu0
      %v797 = vadd.f32 %v585, %v796
      %798 = vmatmul.f32.gmra.mxu0 %v684
      %v799 = vpop.f32.mrf.mxu0
      %v800 = vadd.f32 %v588, %v799
      %801 = vmatmul.f32.gmra.mxu0 %v687
      %v802 = vpop.f32.mrf.mxu0
      %v803 = vadd.f32 %v591, %v802
      %804 = vmatmul.f32.gmra.mxu0 %v690
      %v805 = vpop.f32.mrf.mxu0
      %v806 = vadd.f32 %v594, %v805
      %807 = vmatmul.f32.gmra.mxu0 %v693
      %v808 = vpop.f32.mrf.mxu0
      %v809 = vadd.f32 %v597, %v808
      %810 = vmatmul.f32.gmra.mxu0 %v696
      %v811 = vpop.f32.mrf.mxu0
      %v812 = vadd.f32 %v600, %v811
      %813 = vmatmul.f32.gmra.mxu0 %v699
      %v814 = vpop.f32.mrf.mxu0
      %v815 = vadd.f32 %v603, %v814
      %816 = vmatmul.f32.gmra.mxu0 %v702
      %v817 = vpop.f32.mrf.mxu0
      %v818 = vadd.f32 %v606, %v817
      %819 = vmatmul.f32.gmra.mxu0 %v705
      %v820 = vpop.f32.mrf.mxu0
      %v821 = vadd.f32 %v609, %v820
      %822 = vmatmul.f32.gmra.mxu0 %v708
      %v823 = vpop.f32.mrf.mxu0
      %v824 = vadd.f32 %v612, %v823
      %825 = vmatmul.f32.gmra.mxu0 %v711
      %v826 = vpop.f32.mrf.mxu0
      %v827 = vadd.f32 %v615, %v826
      %828 = vmatmul.f32.gmra.mxu0 %v714
      %v829 = vpop.f32.mrf.mxu0
      %v830 = vadd.f32 %v618, %v829
      %831 = vmatmul.f32.gmra.mxu0 %v717
      %v832 = vpop.f32.mrf.mxu0
      %v833 = vadd.f32 %v621, %v832
      %834 = vdwg.mxu0
      %v835 = vld [vmem:[#allocation2 + $0x2] sm:$0xff]
      %v836 = vld [vmem:[#allocation2 + $0xa] sm:$0xff]
      %v837 = vld [vmem:[#allocation2 + $0x1a] sm:$0xff]
      %v838 = vld [vmem:[#allocation2 + $0x22] sm:$0xff]
      %v839 = vld [vmem:[#allocation2 + $0x32] sm:$0xff]
      %v840 = vld [vmem:[#allocation2 + $0x3a] sm:$0xff]
      %v841 = vld [vmem:[#allocation2 + $0x4a] sm:$0xff]
      %v842 = vld [vmem:[#allocation2 + $0x52] sm:$0xff]
      %v843 = vld [vmem:[#allocation2 + $0x62] sm:$0xff]
      %v844 = vld [vmem:[#allocation2 + $0x6a] sm:$0xff]
      %v845 = vld [vmem:[#allocation2 + $0x7a] sm:$0xff]
      %v846 = vld [vmem:[#allocation2 + $0x82] sm:$0xff]
      %v847 = vld [vmem:[#allocation2 + $0x92] sm:$0xff]
      %v848 = vld [vmem:[#allocation2 + $0x9a] sm:$0xff]
      %v849 = vld [vmem:[#allocation2 + $0xaa] sm:$0xff]
      %v850 = vld [vmem:[#allocation2 + $0xb2] sm:$0xff]
      %v851 = vld [vmem:[#allocation2 + $0xc2] sm:$0xff]
      %v852 = vld [vmem:[#allocation2 + $0xca] sm:$0xff]
      %v853 = vld [vmem:[#allocation2 + $0xda] sm:$0xff]
      %v854 = vld [vmem:[#allocation2 + $0xe2] sm:$0xff]
      %v855 = vld [vmem:[#allocation2 + $0xf2] sm:$0xff]
      %v856 = vld [vmem:[#allocation2 + $0xfa] sm:$0xff]
      %v857 = vld [vmem:[#allocation2 + $0x10a] sm:$0xff]
      %v858 = vld [vmem:[#allocation2 + $0x112] sm:$0xff]
      %v859 = vld [vmem:[#allocation2 + $0x122] sm:$0xff]
      %v860 = vld [vmem:[#allocation2 + $0x12a] sm:$0xff]
      %v861 = vld [vmem:[#allocation2 + $0x13a] sm:$0xff]
      %v862 = vld [vmem:[#allocation2 + $0x142] sm:$0xff]
      %v863 = vld [vmem:[#allocation2 + $0x152] sm:$0xff]
      %v864 = vld [vmem:[#allocation2 + $0x15a] sm:$0xff]
      %v865 = vld [vmem:[#allocation2 + $0x16a] sm:$0xff]
      %v866 = vld [vmem:[#allocation2 + $0x172] sm:$0xff]
      %s867 = scalar_lea.vmem %s1, 8
      %v868 = vld [vmem:[%s867] sm:$0xf]
      %v870 = vsel %vm197, %v835, 0
      %v873 = vsel %vm197, %v836, 0
      %v876 = vsel %vm197, %v837, 0
      %v879 = vsel %vm197, %v838, 0
      %v882 = vsel %vm197, %v839, 0
      %v885 = vsel %vm197, %v840, 0
      %v888 = vsel %vm197, %v841, 0
      %v891 = vsel %vm197, %v842, 0
      %v894 = vsel %vm197, %v843, 0
      %v897 = vsel %vm197, %v844, 0
      %v900 = vsel %vm197, %v845, 0
      %v903 = vsel %vm197, %v846, 0
      %v906 = vsel %vm197, %v847, 0
      %v909 = vsel %vm197, %v848, 0
      %v912 = vsel %vm197, %v849, 0
      %v915 = vsel %vm197, %v850, 0
      %v918 = vsel %vm197, %v851, 0
      %v921 = vsel %vm197, %v852, 0
      %v924 = vsel %vm197, %v853, 0
      %v927 = vsel %vm197, %v854, 0
      %v930 = vsel %vm197, %v855, 0
      %v933 = vsel %vm197, %v856, 0
      %v936 = vsel %vm197, %v857, 0
      %v939 = vsel %vm197, %v858, 0
      %v942 = vsel %vm197, %v859, 0
      %v945 = vsel %vm197, %v860, 0
      %v948 = vsel %vm197, %v861, 0
      %v951 = vsel %vm197, %v862, 0
      %v954 = vsel %vm197, %v863, 0
      %v957 = vsel %vm197, %v864, 0
      %v960 = vsel %vm197, %v865, 0
      %v963 = vsel %vm197, %v866, 0
      %v966 = vsel %vm506, %v868, 0
      %968 = vmatpush.msra.mxu0 0.0
      %969 = vmatpush.msra.mxu0 0.0
      %970 = vmatpush.msra.mxu0 0.0
      %971 = vmatpush.msra.mxu0 0.0
      %972 = vmatpush.msra.mxu0 0.0
      %973 = vmatpush.msra.mxu0 0.0
      %974 = vmatpush.msra.mxu0 0.0
      %975 = vmatpush.msra.mxu0 0.0
      %976 = vmatpush.msra.mxu0 0.0
      %977 = vmatpush.msra.mxu0 0.0
      %978 = vmatpush.msra.mxu0 0.0
      %979 = vmatpush.msra.mxu0 0.0
      %980 = vmatpush.msra.mxu0 0.0
      %981 = vmatpush.msra.mxu0 0.0
      %982 = vmatpush.msra.mxu0 0.0
      %983 = vmatpush.msra.mxu0 %v966
      %984 = vmatmul.f32.gmra.mxu0 %v870
      %v985 = vpop.f32.mrf.mxu0
      %v986 = vadd.f32 0.0, %v985
      %987 = vmatmul.f32.gmra.mxu0 %v873
      %v988 = vpop.f32.mrf.mxu0
      %v989 = vadd.f32 0.0, %v988
      %990 = vmatmul.f32.gmra.mxu0 %v876
      %v991 = vpop.f32.mrf.mxu0
      %v992 = vadd.f32 0.0, %v991
      %993 = vmatmul.f32.gmra.mxu0 %v879
      %v994 = vpop.f32.mrf.mxu0
      %v995 = vadd.f32 0.0, %v994
      %996 = vmatmul.f32.gmra.mxu0 %v882
      %v997 = vpop.f32.mrf.mxu0
      %v998 = vadd.f32 0.0, %v997
      %999 = vmatmul.f32.gmra.mxu0 %v885
      %v1000 = vpop.f32.mrf.mxu0
      %v1001 = vadd.f32 0.0, %v1000
      %1002 = vmatmul.f32.gmra.mxu0 %v888
      %v1003 = vpop.f32.mrf.mxu0
      %v1004 = vadd.f32 0.0, %v1003
      %1005 = vmatmul.f32.gmra.mxu0 %v891
      %v1006 = vpop.f32.mrf.mxu0
      %v1007 = vadd.f32 0.0, %v1006
      %1008 = vmatmul.f32.gmra.mxu0 %v894
      %v1009 = vpop.f32.mrf.mxu0
      %v1010 = vadd.f32 0.0, %v1009
      %1011 = vmatmul.f32.gmra.mxu0 %v897
      %v1012 = vpop.f32.mrf.mxu0
      %v1013 = vadd.f32 0.0, %v1012
      %1014 = vmatmul.f32.gmra.mxu0 %v900
      %v1015 = vpop.f32.mrf.mxu0
      %v1016 = vadd.f32 0.0, %v1015
      %1017 = vmatmul.f32.gmra.mxu0 %v903
      %v1018 = vpop.f32.mrf.mxu0
      %v1019 = vadd.f32 0.0, %v1018
      %1020 = vmatmul.f32.gmra.mxu0 %v906
      %v1021 = vpop.f32.mrf.mxu0
      %v1022 = vadd.f32 0.0, %v1021
      %1023 = vmatmul.f32.gmra.mxu0 %v909
      %v1024 = vpop.f32.mrf.mxu0
      %v1025 = vadd.f32 0.0, %v1024
      %1026 = vmatmul.f32.gmra.mxu0 %v912
      %v1027 = vpop.f32.mrf.mxu0
      %v1028 = vadd.f32 0.0, %v1027
      %1029 = vmatmul.f32.gmra.mxu0 %v915
      %v1030 = vpop.f32.mrf.mxu0
      %v1031 = vadd.f32 0.0, %v1030
      %1032 = vmatmul.f32.gmra.mxu0 %v918
      %v1033 = vpop.f32.mrf.mxu0
      %v1034 = vadd.f32 0.0, %v1033
      %1035 = vmatmul.f32.gmra.mxu0 %v921
      %v1036 = vpop.f32.mrf.mxu0
      %v1037 = vadd.f32 0.0, %v1036
      %1038 = vmatmul.f32.gmra.mxu0 %v924
      %v1039 = vpop.f32.mrf.mxu0
      %v1040 = vadd.f32 0.0, %v1039
      %1041 = vmatmul.f32.gmra.mxu0 %v927
      %v1042 = vpop.f32.mrf.mxu0
      %v1043 = vadd.f32 0.0, %v1042
      %1044 = vmatmul.f32.gmra.mxu0 %v930
      %v1045 = vpop.f32.mrf.mxu0
      %v1046 = vadd.f32 0.0, %v1045
      %1047 = vmatmul.f32.gmra.mxu0 %v933
      %v1048 = vpop.f32.mrf.mxu0
      %v1049 = vadd.f32 0.0, %v1048
      %1050 = vmatmul.f32.gmra.mxu0 %v936
      %v1051 = vpop.f32.mrf.mxu0
      %v1052 = vadd.f32 0.0, %v1051
      %1053 = vmatmul.f32.gmra.mxu0 %v939
      %v1054 = vpop.f32.mrf.mxu0
      %v1055 = vadd.f32 0.0, %v1054
      %1056 = vmatmul.f32.gmra.mxu0 %v942
      %v1057 = vpop.f32.mrf.mxu0
      %v1058 = vadd.f32 0.0, %v1057
      %1059 = vmatmul.f32.gmra.mxu0 %v945
      %v1060 = vpop.f32.mrf.mxu0
      %v1061 = vadd.f32 0.0, %v1060
      %1062 = vmatmul.f32.gmra.mxu0 %v948
      %v1063 = vpop.f32.mrf.mxu0
      %v1064 = vadd.f32 0.0, %v1063
      %1065 = vmatmul.f32.gmra.mxu0 %v951
      %v1066 = vpop.f32.mrf.mxu0
      %v1067 = vadd.f32 0.0, %v1066
      %1068 = vmatmul.f32.gmra.mxu0 %v954
      %v1069 = vpop.f32.mrf.mxu0
      %v1070 = vadd.f32 0.0, %v1069
      %1071 = vmatmul.f32.gmra.mxu0 %v957
      %v1072 = vpop.f32.mrf.mxu0
      %v1073 = vadd.f32 0.0, %v1072
      %1074 = vmatmul.f32.gmra.mxu0 %v960
      %v1075 = vpop.f32.mrf.mxu0
      %v1076 = vadd.f32 0.0, %v1075
      %1077 = vmatmul.f32.gmra.mxu0 %v963
      %v1078 = vpop.f32.mrf.mxu0
      %v1079 = vadd.f32 0.0, %v1078
      %1080 = vdwg.mxu0
      %v1081 = vadd.f32 %v740, %v986
      %v1082 = vadd.f32 %v743, %v989
      %v1083 = vadd.f32 %v746, %v992
      %v1084 = vadd.f32 %v749, %v995
      %v1085 = vadd.f32 %v752, %v998
      %v1086 = vadd.f32 %v755, %v1001
      %v1087 = vadd.f32 %v758, %v1004
      %v1088 = vadd.f32 %v761, %v1007
      %v1089 = vadd.f32 %v764, %v1010
      %v1090 = vadd.f32 %v767, %v1013
      %v1091 = vadd.f32 %v770, %v1016
      %v1092 = vadd.f32 %v773, %v1019
      %v1093 = vadd.f32 %v776, %v1022
      %v1094 = vadd.f32 %v779, %v1025
      %v1095 = vadd.f32 %v782, %v1028
      %v1096 = vadd.f32 %v785, %v1031
      %v1097 = vadd.f32 %v788, %v1034
      %v1098 = vadd.f32 %v791, %v1037
      %v1099 = vadd.f32 %v794, %v1040
      %v1100 = vadd.f32 %v797, %v1043
      %v1101 = vadd.f32 %v800, %v1046
      %v1102 = vadd.f32 %v803, %v1049
      %v1103 = vadd.f32 %v806, %v1052
      %v1104 = vadd.f32 %v809, %v1055
      %v1105 = vadd.f32 %v812, %v1058
      %v1106 = vadd.f32 %v815, %v1061
      %v1107 = vadd.f32 %v818, %v1064
      %v1108 = vadd.f32 %v821, %v1067
      %v1109 = vadd.f32 %v824, %v1070
      %v1110 = vadd.f32 %v827, %v1073
      %v1111 = vadd.f32 %v830, %v1076
      %v1112 = vadd.f32 %v833, %v1079
      %v1113 = vld [vmem:[%s287] sm:$0xff]
      %v1114 = vld [vmem:[%s287 + $0x8] sm:$0xff]
      %v1115 = vld [vmem:[%s287 + $0x18] sm:$0xff]
      %v1116 = vld [vmem:[%s287 + $0x20] sm:$0xff]
      %v1117 = vld [vmem:[%s287 + $0x30] sm:$0xff]
      %v1118 = vld [vmem:[%s287 + $0x38] sm:$0xff]
      %v1119 = vld [vmem:[%s287 + $0x48] sm:$0xff]
      %v1120 = vld [vmem:[%s287 + $0x50] sm:$0xff]
      %v1121 = vld [vmem:[%s287 + $0x60] sm:$0xff]
      %v1122 = vld [vmem:[%s287 + $0x68] sm:$0xff]
      %v1123 = vld [vmem:[%s287 + $0x78] sm:$0xff]
      %v1124 = vld [vmem:[%s287 + $0x80] sm:$0xff]
      %v1125 = vld [vmem:[%s287 + $0x90] sm:$0xff]
      %v1126 = vld [vmem:[%s287 + $0x98] sm:$0xff]
      %v1127 = vld [vmem:[%s287 + $0xa8] sm:$0xff]
      %v1128 = vld [vmem:[%s287 + $0xb0] sm:$0xff]
      %v1129 = vld [vmem:[%s287 + $0xc0] sm:$0xff]
      %v1130 = vld [vmem:[%s287 + $0xc8] sm:$0xff]
      %v1131 = vld [vmem:[%s287 + $0xd8] sm:$0xff]
      %v1132 = vld [vmem:[%s287 + $0xe0] sm:$0xff]
      %v1133 = vld [vmem:[%s287 + $0xf0] sm:$0xff]
      %v1134 = vld [vmem:[%s287 + $0xf8] sm:$0xff]
      %v1135 = vld [vmem:[%s287 + $0x108] sm:$0xff]
      %v1136 = vld [vmem:[%s287 + $0x110] sm:$0xff]
      %v1137 = vld [vmem:[%s287 + $0x120] sm:$0xff]
      %v1138 = vld [vmem:[%s287 + $0x128] sm:$0xff]
      %v1139 = vld [vmem:[%s287 + $0x138] sm:$0xff]
      %v1140 = vld [vmem:[%s287 + $0x140] sm:$0xff]
      %v1141 = vld [vmem:[%s287 + $0x150] sm:$0xff]
      %v1142 = vld [vmem:[%s287 + $0x158] sm:$0xff]
      %v1143 = vld [vmem:[%s287 + $0x168] sm:$0xff]
      %v1144 = vld [vmem:[%s287 + $0x170] sm:$0xff]
      %s1145 = scalar_lea.vmem %s1, 12
      %v1146 = vld [vmem:[%s1145] sm:$0xf]
      %v1148 = vsel %vm197, %v1113, 0
      %v1151 = vsel %vm197, %v1114, 0
      %v1154 = vsel %vm197, %v1115, 0
      %v1157 = vsel %vm197, %v1116, 0
      %v1160 = vsel %vm197, %v1117, 0
      %v1163 = vsel %vm197, %v1118, 0
      %v1166 = vsel %vm197, %v1119, 0
      %v1169 = vsel %vm197, %v1120, 0
      %v1172 = vsel %vm197, %v1121, 0
      %v1175 = vsel %vm197, %v1122, 0
      %v1178 = vsel %vm197, %v1123, 0
      %v1181 = vsel %vm197, %v1124, 0
      %v1184 = vsel %vm197, %v1125, 0
      %v1187 = vsel %vm197, %v1126, 0
      %v1190 = vsel %vm197, %v1127, 0
      %v1193 = vsel %vm197, %v1128, 0
      %v1196 = vsel %vm197, %v1129, 0
      %v1199 = vsel %vm197, %v1130, 0
      %v1202 = vsel %vm197, %v1131, 0
      %v1205 = vsel %vm197, %v1132, 0
      %v1208 = vsel %vm197, %v1133, 0
      %v1211 = vsel %vm197, %v1134, 0
      %v1214 = vsel %vm197, %v1135, 0
      %v1217 = vsel %vm197, %v1136, 0
      %v1220 = vsel %vm197, %v1137, 0
      %v1223 = vsel %vm197, %v1138, 0
      %v1226 = vsel %vm197, %v1139, 0
      %v1229 = vsel %vm197, %v1140, 0
      %v1232 = vsel %vm197, %v1141, 0
      %v1235 = vsel %vm197, %v1142, 0
      %v1238 = vsel %vm197, %v1143, 0
      %v1241 = vsel %vm197, %v1144, 0
      %v1244 = vsel %vm506, %v1146, 0
      %1246 = vmatpush.msra.mxu0 0.0
      %1247 = vmatpush.msra.mxu0 0.0
      %1248 = vmatpush.msra.mxu0 0.0
      %1249 = vmatpush.msra.mxu0 0.0
      %1250 = vmatpush.msra.mxu0 0.0
      %1251 = vmatpush.msra.mxu0 0.0
      %1252 = vmatpush.msra.mxu0 0.0
      %1253 = vmatpush.msra.mxu0 0.0
      %1254 = vmatpush.msra.mxu0 0.0
      %1255 = vmatpush.msra.mxu0 0.0
      %1256 = vmatpush.msra.mxu0 0.0
      %1257 = vmatpush.msra.mxu0 0.0
      %1258 = vmatpush.msra.mxu0 0.0
      %1259 = vmatpush.msra.mxu0 0.0
      %1260 = vmatpush.msra.mxu0 0.0
      %1261 = vmatpush.msra.mxu0 %v1244
      %1262 = vmatmul.f32.gmra.mxu0 %v1148
      %v1263 = vpop.f32.mrf.mxu0
      %v1264 = vadd.f32 0.0, %v1263
      %1265 = vmatmul.f32.gmra.mxu0 %v1151
      %v1266 = vpop.f32.mrf.mxu0
      %v1267 = vadd.f32 0.0, %v1266
      %1268 = vmatmul.f32.gmra.mxu0 %v1154
      %v1269 = vpop.f32.mrf.mxu0
      %v1270 = vadd.f32 0.0, %v1269
      %1271 = vmatmul.f32.gmra.mxu0 %v1157
      %v1272 = vpop.f32.mrf.mxu0
      %v1273 = vadd.f32 0.0, %v1272
      %1274 = vmatmul.f32.gmra.mxu0 %v1160
      %v1275 = vpop.f32.mrf.mxu0
      %v1276 = vadd.f32 0.0, %v1275
      %1277 = vmatmul.f32.gmra.mxu0 %v1163
      %v1278 = vpop.f32.mrf.mxu0
      %v1279 = vadd.f32 0.0, %v1278
      %1280 = vmatmul.f32.gmra.mxu0 %v1166
      %v1281 = vpop.f32.mrf.mxu0
      %v1282 = vadd.f32 0.0, %v1281
      %1283 = vmatmul.f32.gmra.mxu0 %v1169
      %v1284 = vpop.f32.mrf.mxu0
      %v1285 = vadd.f32 0.0, %v1284
      %1286 = vmatmul.f32.gmra.mxu0 %v1172
      %v1287 = vpop.f32.mrf.mxu0
      %v1288 = vadd.f32 0.0, %v1287
      %1289 = vmatmul.f32.gmra.mxu0 %v1175
      %v1290 = vpop.f32.mrf.mxu0
      %v1291 = vadd.f32 0.0, %v1290
      %1292 = vmatmul.f32.gmra.mxu0 %v1178
      %v1293 = vpop.f32.mrf.mxu0
      %v1294 = vadd.f32 0.0, %v1293
      %1295 = vmatmul.f32.gmra.mxu0 %v1181
      %v1296 = vpop.f32.mrf.mxu0
      %v1297 = vadd.f32 0.0, %v1296
      %1298 = vmatmul.f32.gmra.mxu0 %v1184
      %v1299 = vpop.f32.mrf.mxu0
      %v1300 = vadd.f32 0.0, %v1299
      %1301 = vmatmul.f32.gmra.mxu0 %v1187
      %v1302 = vpop.f32.mrf.mxu0
      %v1303 = vadd.f32 0.0, %v1302
      %1304 = vmatmul.f32.gmra.mxu0 %v1190
      %v1305 = vpop.f32.mrf.mxu0
      %v1306 = vadd.f32 0.0, %v1305
      %1307 = vmatmul.f32.gmra.mxu0 %v1193
      %v1308 = vpop.f32.mrf.mxu0
      %v1309 = vadd.f32 0.0, %v1308
      %1310 = vmatmul.f32.gmra.mxu0 %v1196
      %v1311 = vpop.f32.mrf.mxu0
      %v1312 = vadd.f32 0.0, %v1311
      %1313 = vmatmul.f32.gmra.mxu0 %v1199
      %v1314 = vpop.f32.mrf.mxu0
      %v1315 = vadd.f32 0.0, %v1314
      %1316 = vmatmul.f32.gmra.mxu0 %v1202
      %v1317 = vpop.f32.mrf.mxu0
      %v1318 = vadd.f32 0.0, %v1317
      %1319 = vmatmul.f32.gmra.mxu0 %v1205
      %v1320 = vpop.f32.mrf.mxu0
      %v1321 = vadd.f32 0.0, %v1320
      %1322 = vmatmul.f32.gmra.mxu0 %v1208
      %v1323 = vpop.f32.mrf.mxu0
      %v1324 = vadd.f32 0.0, %v1323
      %1325 = vmatmul.f32.gmra.mxu0 %v1211
      %v1326 = vpop.f32.mrf.mxu0
      %v1327 = vadd.f32 0.0, %v1326
      %1328 = vmatmul.f32.gmra.mxu0 %v1214
      %v1329 = vpop.f32.mrf.mxu0
      %v1330 = vadd.f32 0.0, %v1329
      %1331 = vmatmul.f32.gmra.mxu0 %v1217
      %v1332 = vpop.f32.mrf.mxu0
      %v1333 = vadd.f32 0.0, %v1332
      %1334 = vmatmul.f32.gmra.mxu0 %v1220
      %v1335 = vpop.f32.mrf.mxu0
      %v1336 = vadd.f32 0.0, %v1335
      %1337 = vmatmul.f32.gmra.mxu0 %v1223
      %v1338 = vpop.f32.mrf.mxu0
      %v1339 = vadd.f32 0.0, %v1338
      %1340 = vmatmul.f32.gmra.mxu0 %v1226
      %v1341 = vpop.f32.mrf.mxu0
      %v1342 = vadd.f32 0.0, %v1341
      %1343 = vmatmul.f32.gmra.mxu0 %v1229
      %v1344 = vpop.f32.mrf.mxu0
      %v1345 = vadd.f32 0.0, %v1344
      %1346 = vmatmul.f32.gmra.mxu0 %v1232
      %v1347 = vpop.f32.mrf.mxu0
      %v1348 = vadd.f32 0.0, %v1347
      %1349 = vmatmul.f32.gmra.mxu0 %v1235
      %v1350 = vpop.f32.mrf.mxu0
      %v1351 = vadd.f32 0.0, %v1350
      %1352 = vmatmul.f32.gmra.mxu0 %v1238
      %v1353 = vpop.f32.mrf.mxu0
      %v1354 = vadd.f32 0.0, %v1353
      %1355 = vmatmul.f32.gmra.mxu0 %v1241
      %v1356 = vpop.f32.mrf.mxu0
      %v1357 = vadd.f32 0.0, %v1356
      %1358 = vdwg.mxu0
      %v1359 = vadd.f32 %v1081, %v1264
      %v1360 = vadd.f32 %v1082, %v1267
      %v1361 = vadd.f32 %v1083, %v1270
      %v1362 = vadd.f32 %v1084, %v1273
      %v1363 = vadd.f32 %v1085, %v1276
      %v1364 = vadd.f32 %v1086, %v1279
      %v1365 = vadd.f32 %v1087, %v1282
      %v1366 = vadd.f32 %v1088, %v1285
      %v1367 = vadd.f32 %v1089, %v1288
      %v1368 = vadd.f32 %v1090, %v1291
      %v1369 = vadd.f32 %v1091, %v1294
      %v1370 = vadd.f32 %v1092, %v1297
      %v1371 = vadd.f32 %v1093, %v1300
      %v1372 = vadd.f32 %v1094, %v1303
      %v1373 = vadd.f32 %v1095, %v1306
      %v1374 = vadd.f32 %v1096, %v1309
      %v1375 = vadd.f32 %v1097, %v1312
      %v1376 = vadd.f32 %v1098, %v1315
      %v1377 = vadd.f32 %v1099, %v1318
      %v1378 = vadd.f32 %v1100, %v1321
      %v1379 = vadd.f32 %v1101, %v1324
      %v1380 = vadd.f32 %v1102, %v1327
      %v1381 = vadd.f32 %v1103, %v1330
      %v1382 = vadd.f32 %v1104, %v1333
      %v1383 = vadd.f32 %v1105, %v1336
      %v1384 = vadd.f32 %v1106, %v1339
      %v1385 = vadd.f32 %v1107, %v1342
      %v1386 = vadd.f32 %v1108, %v1345
      %v1387 = vadd.f32 %v1109, %v1348
      %v1388 = vadd.f32 %v1110, %v1351
      %v1389 = vadd.f32 %v1111, %v1354
      %v1390 = vadd.f32 %v1112, %v1357
      %v1391 = vld [vmem:[%s287 + $0x1] sm:$0xff]
      %v1392 = vld [vmem:[%s287 + $0x9] sm:$0xff]
      %v1393 = vld [vmem:[%s287 + $0x19] sm:$0xff]
      %v1394 = vld [vmem:[%s287 + $0x21] sm:$0xff]
      %v1395 = vld [vmem:[%s287 + $0x31] sm:$0xff]
      %v1396 = vld [vmem:[%s287 + $0x39] sm:$0xff]
      %v1397 = vld [vmem:[%s287 + $0x49] sm:$0xff]
      %v1398 = vld [vmem:[%s287 + $0x51] sm:$0xff]
      %v1399 = vld [vmem:[%s287 + $0x61] sm:$0xff]
      %v1400 = vld [vmem:[%s287 + $0x69] sm:$0xff]
      %v1401 = vld [vmem:[%s287 + $0x79] sm:$0xff]
      %v1402 = vld [vmem:[%s287 + $0x81] sm:$0xff]
      %v1403 = vld [vmem:[%s287 + $0x91] sm:$0xff]
      %v1404 = vld [vmem:[%s287 + $0x99] sm:$0xff]
      %v1405 = vld [vmem:[%s287 + $0xa9] sm:$0xff]
      %v1406 = vld [vmem:[%s287 + $0xb1] sm:$0xff]
      %v1407 = vld [vmem:[%s287 + $0xc1] sm:$0xff]
      %v1408 = vld [vmem:[%s287 + $0xc9] sm:$0xff]
      %v1409 = vld [vmem:[%s287 + $0xd9] sm:$0xff]
      %v1410 = vld [vmem:[%s287 + $0xe1] sm:$0xff]
      %v1411 = vld [vmem:[%s287 + $0xf1] sm:$0xff]
      %v1412 = vld [vmem:[%s287 + $0xf9] sm:$0xff]
      %v1413 = vld [vmem:[%s287 + $0x109] sm:$0xff]
      %v1414 = vld [vmem:[%s287 + $0x111] sm:$0xff]
      %v1415 = vld [vmem:[%s287 + $0x121] sm:$0xff]
      %v1416 = vld [vmem:[%s287 + $0x129] sm:$0xff]
      %v1417 = vld [vmem:[%s287 + $0x139] sm:$0xff]
      %v1418 = vld [vmem:[%s287 + $0x141] sm:$0xff]
      %v1419 = vld [vmem:[%s287 + $0x151] sm:$0xff]
      %v1420 = vld [vmem:[%s287 + $0x159] sm:$0xff]
      %v1421 = vld [vmem:[%s287 + $0x169] sm:$0xff]
      %v1422 = vld [vmem:[%s287 + $0x171] sm:$0xff]
      %s1423 = scalar_lea.vmem %s1, 16
      %v1424 = vld [vmem:[%s1423] sm:$0xf]
      %v1426 = vsel %vm197, %v1391, 0
      %v1429 = vsel %vm197, %v1392, 0
      %v1432 = vsel %vm197, %v1393, 0
      %v1435 = vsel %vm197, %v1394, 0
      %v1438 = vsel %vm197, %v1395, 0
      %v1441 = vsel %vm197, %v1396, 0
      %v1444 = vsel %vm197, %v1397, 0
      %v1447 = vsel %vm197, %v1398, 0
      %v1450 = vsel %vm197, %v1399, 0
      %v1453 = vsel %vm197, %v1400, 0
      %v1456 = vsel %vm197, %v1401, 0
      %v1459 = vsel %vm197, %v1402, 0
      %v1462 = vsel %vm197, %v1403, 0
      %v1465 = vsel %vm197, %v1404, 0
      %v1468 = vsel %vm197, %v1405, 0
      %v1471 = vsel %vm197, %v1406, 0
      %v1474 = vsel %vm197, %v1407, 0
      %v1477 = vsel %vm197, %v1408, 0
      %v1480 = vsel %vm197, %v1409, 0
      %v1483 = vsel %vm197, %v1410, 0
      %v1486 = vsel %vm197, %v1411, 0
      %v1489 = vsel %vm197, %v1412, 0
      %v1492 = vsel %vm197, %v1413, 0
      %v1495 = vsel %vm197, %v1414, 0
      %v1498 = vsel %vm197, %v1415, 0
      %v1501 = vsel %vm197, %v1416, 0
      %v1504 = vsel %vm197, %v1417, 0
      %v1507 = vsel %vm197, %v1418, 0
      %v1510 = vsel %vm197, %v1419, 0
      %v1513 = vsel %vm197, %v1420, 0
      %v1516 = vsel %vm197, %v1421, 0
      %v1519 = vsel %vm197, %v1422, 0
      %v1522 = vsel %vm506, %v1424, 0
      %1524 = vmatpush.msra.mxu0 0.0
      %1525 = vmatpush.msra.mxu0 0.0
      %1526 = vmatpush.msra.mxu0 0.0
      %1527 = vmatpush.msra.mxu0 0.0
      %1528 = vmatpush.msra.mxu0 0.0
      %1529 = vmatpush.msra.mxu0 0.0
      %1530 = vmatpush.msra.mxu0 0.0
      %1531 = vmatpush.msra.mxu0 0.0
      %1532 = vmatpush.msra.mxu0 0.0
      %1533 = vmatpush.msra.mxu0 0.0
      %1534 = vmatpush.msra.mxu0 0.0
      %1535 = vmatpush.msra.mxu0 0.0
      %1536 = vmatpush.msra.mxu0 0.0
      %1537 = vmatpush.msra.mxu0 0.0
      %1538 = vmatpush.msra.mxu0 0.0
      %1539 = vmatpush.msra.mxu0 %v1522
      %1540 = vmatmul.f32.gmra.mxu0 %v1426
      %v1541 = vpop.f32.mrf.mxu0
      %v1542 = vadd.f32 0.0, %v1541
      %1543 = vmatmul.f32.gmra.mxu0 %v1429
      %v1544 = vpop.f32.mrf.mxu0
      %v1545 = vadd.f32 0.0, %v1544
      %1546 = vmatmul.f32.gmra.mxu0 %v1432
      %v1547 = vpop.f32.mrf.mxu0
      %v1548 = vadd.f32 0.0, %v1547
      %1549 = vmatmul.f32.gmra.mxu0 %v1435
      %v1550 = vpop.f32.mrf.mxu0
      %v1551 = vadd.f32 0.0, %v1550
      %1552 = vmatmul.f32.gmra.mxu0 %v1438
      %v1553 = vpop.f32.mrf.mxu0
      %v1554 = vadd.f32 0.0, %v1553
      %1555 = vmatmul.f32.gmra.mxu0 %v1441
      %v1556 = vpop.f32.mrf.mxu0
      %v1557 = vadd.f32 0.0, %v1556
      %1558 = vmatmul.f32.gmra.mxu0 %v1444
      %v1559 = vpop.f32.mrf.mxu0
      %v1560 = vadd.f32 0.0, %v1559
      %1561 = vmatmul.f32.gmra.mxu0 %v1447
      %v1562 = vpop.f32.mrf.mxu0
      %v1563 = vadd.f32 0.0, %v1562
      %1564 = vmatmul.f32.gmra.mxu0 %v1450
      %v1565 = vpop.f32.mrf.mxu0
      %v1566 = vadd.f32 0.0, %v1565
      %1567 = vmatmul.f32.gmra.mxu0 %v1453
      %v1568 = vpop.f32.mrf.mxu0
      %v1569 = vadd.f32 0.0, %v1568
      %1570 = vmatmul.f32.gmra.mxu0 %v1456
      %v1571 = vpop.f32.mrf.mxu0
      %v1572 = vadd.f32 0.0, %v1571
      %1573 = vmatmul.f32.gmra.mxu0 %v1459
      %v1574 = vpop.f32.mrf.mxu0
      %v1575 = vadd.f32 0.0, %v1574
      %1576 = vmatmul.f32.gmra.mxu0 %v1462
      %v1577 = vpop.f32.mrf.mxu0
      %v1578 = vadd.f32 0.0, %v1577
      %1579 = vmatmul.f32.gmra.mxu0 %v1465
      %v1580 = vpop.f32.mrf.mxu0
      %v1581 = vadd.f32 0.0, %v1580
      %1582 = vmatmul.f32.gmra.mxu0 %v1468
      %v1583 = vpop.f32.mrf.mxu0
      %v1584 = vadd.f32 0.0, %v1583
      %1585 = vmatmul.f32.gmra.mxu0 %v1471
      %v1586 = vpop.f32.mrf.mxu0
      %v1587 = vadd.f32 0.0, %v1586
      %1588 = vmatmul.f32.gmra.mxu0 %v1474
      %v1589 = vpop.f32.mrf.mxu0
      %v1590 = vadd.f32 0.0, %v1589
      %1591 = vmatmul.f32.gmra.mxu0 %v1477
      %v1592 = vpop.f32.mrf.mxu0
      %v1593 = vadd.f32 0.0, %v1592
      %1594 = vmatmul.f32.gmra.mxu0 %v1480
      %v1595 = vpop.f32.mrf.mxu0
      %v1596 = vadd.f32 0.0, %v1595
      %1597 = vmatmul.f32.gmra.mxu0 %v1483
      %v1598 = vpop.f32.mrf.mxu0
      %v1599 = vadd.f32 0.0, %v1598
      %1600 = vmatmul.f32.gmra.mxu0 %v1486
      %v1601 = vpop.f32.mrf.mxu0
      %v1602 = vadd.f32 0.0, %v1601
      %1603 = vmatmul.f32.gmra.mxu0 %v1489
      %v1604 = vpop.f32.mrf.mxu0
      %v1605 = vadd.f32 0.0, %v1604
      %1606 = vmatmul.f32.gmra.mxu0 %v1492
      %v1607 = vpop.f32.mrf.mxu0
      %v1608 = vadd.f32 0.0, %v1607
      %1609 = vmatmul.f32.gmra.mxu0 %v1495
      %v1610 = vpop.f32.mrf.mxu0
      %v1611 = vadd.f32 0.0, %v1610
      %1612 = vmatmul.f32.gmra.mxu0 %v1498
      %v1613 = vpop.f32.mrf.mxu0
      %v1614 = vadd.f32 0.0, %v1613
      %1615 = vmatmul.f32.gmra.mxu0 %v1501
      %v1616 = vpop.f32.mrf.mxu0
      %v1617 = vadd.f32 0.0, %v1616
      %1618 = vmatmul.f32.gmra.mxu0 %v1504
      %v1619 = vpop.f32.mrf.mxu0
      %v1620 = vadd.f32 0.0, %v1619
      %1621 = vmatmul.f32.gmra.mxu0 %v1507
      %v1622 = vpop.f32.mrf.mxu0
      %v1623 = vadd.f32 0.0, %v1622
      %1624 = vmatmul.f32.gmra.mxu0 %v1510
      %v1625 = vpop.f32.mrf.mxu0
      %v1626 = vadd.f32 0.0, %v1625
      %1627 = vmatmul.f32.gmra.mxu0 %v1513
      %v1628 = vpop.f32.mrf.mxu0
      %v1629 = vadd.f32 0.0, %v1628
      %1630 = vmatmul.f32.gmra.mxu0 %v1516
      %v1631 = vpop.f32.mrf.mxu0
      %v1632 = vadd.f32 0.0, %v1631
      %1633 = vmatmul.f32.gmra.mxu0 %v1519
      %v1634 = vpop.f32.mrf.mxu0
      %v1635 = vadd.f32 0.0, %v1634
      %1636 = vdwg.mxu0
      %v1637 = vadd.f32 %v1359, %v1542
      %v1638 = vadd.f32 %v1360, %v1545
      %v1639 = vadd.f32 %v1361, %v1548
      %v1640 = vadd.f32 %v1362, %v1551
      %v1641 = vadd.f32 %v1363, %v1554
      %v1642 = vadd.f32 %v1364, %v1557
      %v1643 = vadd.f32 %v1365, %v1560
      %v1644 = vadd.f32 %v1366, %v1563
      %v1645 = vadd.f32 %v1367, %v1566
      %v1646 = vadd.f32 %v1368, %v1569
      %v1647 = vadd.f32 %v1369, %v1572
      %v1648 = vadd.f32 %v1370, %v1575
      %v1649 = vadd.f32 %v1371, %v1578
      %v1650 = vadd.f32 %v1372, %v1581
      %v1651 = vadd.f32 %v1373, %v1584
      %v1652 = vadd.f32 %v1374, %v1587
      %v1653 = vadd.f32 %v1375, %v1590
      %v1654 = vadd.f32 %v1376, %v1593
      %v1655 = vadd.f32 %v1377, %v1596
      %v1656 = vadd.f32 %v1378, %v1599
      %v1657 = vadd.f32 %v1379, %v1602
      %v1658 = vadd.f32 %v1380, %v1605
      %v1659 = vadd.f32 %v1381, %v1608
      %v1660 = vadd.f32 %v1382, %v1611
      %v1661 = vadd.f32 %v1383, %v1614
      %v1662 = vadd.f32 %v1384, %v1617
      %v1663 = vadd.f32 %v1385, %v1620
      %v1664 = vadd.f32 %v1386, %v1623
      %v1665 = vadd.f32 %v1387, %v1626
      %v1666 = vadd.f32 %v1388, %v1629
      %v1667 = vadd.f32 %v1389, %v1632
      %v1668 = vadd.f32 %v1390, %v1635
      %v1669 = vld [vmem:[%s287 + $0x2] sm:$0xff]
      %v1670 = vld [vmem:[%s287 + $0xa] sm:$0xff]
      %v1671 = vld [vmem:[%s287 + $0x1a] sm:$0xff]
      %v1672 = vld [vmem:[%s287 + $0x22] sm:$0xff]
      %v1673 = vld [vmem:[%s287 + $0x32] sm:$0xff]
      %v1674 = vld [vmem:[%s287 + $0x3a] sm:$0xff]
      %v1675 = vld [vmem:[%s287 + $0x4a] sm:$0xff]
      %v1676 = vld [vmem:[%s287 + $0x52] sm:$0xff]
      %v1677 = vld [vmem:[%s287 + $0x62] sm:$0xff]
      %v1678 = vld [vmem:[%s287 + $0x6a] sm:$0xff]
      %v1679 = vld [vmem:[%s287 + $0x7a] sm:$0xff]
      %v1680 = vld [vmem:[%s287 + $0x82] sm:$0xff]
      %v1681 = vld [vmem:[%s287 + $0x92] sm:$0xff]
      %v1682 = vld [vmem:[%s287 + $0x9a] sm:$0xff]
      %v1683 = vld [vmem:[%s287 + $0xaa] sm:$0xff]
      %v1684 = vld [vmem:[%s287 + $0xb2] sm:$0xff]
      %v1685 = vld [vmem:[%s287 + $0xc2] sm:$0xff]
      %v1686 = vld [vmem:[%s287 + $0xca] sm:$0xff]
      %v1687 = vld [vmem:[%s287 + $0xda] sm:$0xff]
      %v1688 = vld [vmem:[%s287 + $0xe2] sm:$0xff]
      %v1689 = vld [vmem:[%s287 + $0xf2] sm:$0xff]
      %v1690 = vld [vmem:[%s287 + $0xfa] sm:$0xff]
      %v1691 = vld [vmem:[%s287 + $0x10a] sm:$0xff]
      %v1692 = vld [vmem:[%s287 + $0x112] sm:$0xff]
      %v1693 = vld [vmem:[%s287 + $0x122] sm:$0xff]
      %v1694 = vld [vmem:[%s287 + $0x12a] sm:$0xff]
      %v1695 = vld [vmem:[%s287 + $0x13a] sm:$0xff]
      %v1696 = vld [vmem:[%s287 + $0x142] sm:$0xff]
      %v1697 = vld [vmem:[%s287 + $0x152] sm:$0xff]
      %v1698 = vld [vmem:[%s287 + $0x15a] sm:$0xff]
      %v1699 = vld [vmem:[%s287 + $0x16a] sm:$0xff]
      %v1700 = vld [vmem:[%s287 + $0x172] sm:$0xff]
      %s1701 = scalar_lea.vmem %s1, 20
      %v1702 = vld [vmem:[%s1701] sm:$0xf]
      %v1704 = vsel %vm197, %v1669, 0
      %v1707 = vsel %vm197, %v1670, 0
      %v1710 = vsel %vm197, %v1671, 0
      %v1713 = vsel %vm197, %v1672, 0
      %v1716 = vsel %vm197, %v1673, 0
      %v1719 = vsel %vm197, %v1674, 0
      %v1722 = vsel %vm197, %v1675, 0
      %v1725 = vsel %vm197, %v1676, 0
      %v1728 = vsel %vm197, %v1677, 0
      %v1731 = vsel %vm197, %v1678, 0
      %v1734 = vsel %vm197, %v1679, 0
      %v1737 = vsel %vm197, %v1680, 0
      %v1740 = vsel %vm197, %v1681, 0
      %v1743 = vsel %vm197, %v1682, 0
      %v1746 = vsel %vm197, %v1683, 0
      %v1749 = vsel %vm197, %v1684, 0
      %v1752 = vsel %vm197, %v1685, 0
      %v1755 = vsel %vm197, %v1686, 0
      %v1758 = vsel %vm197, %v1687, 0
      %v1761 = vsel %vm197, %v1688, 0
      %v1764 = vsel %vm197, %v1689, 0
      %v1767 = vsel %vm197, %v1690, 0
      %v1770 = vsel %vm197, %v1691, 0
      %v1773 = vsel %vm197, %v1692, 0
      %v1776 = vsel %vm197, %v1693, 0
      %v1779 = vsel %vm197, %v1694, 0
      %v1782 = vsel %vm197, %v1695, 0
      %v1785 = vsel %vm197, %v1696, 0
      %v1788 = vsel %vm197, %v1697, 0
      %v1791 = vsel %vm197, %v1698, 0
      %v1794 = vsel %vm197, %v1699, 0
      %v1797 = vsel %vm197, %v1700, 0
      %v1800 = vsel %vm506, %v1702, 0
      %1802 = vmatpush.msra.mxu0 0.0
      %1803 = vmatpush.msra.mxu0 0.0
      %1804 = vmatpush.msra.mxu0 0.0
      %1805 = vmatpush.msra.mxu0 0.0
      %1806 = vmatpush.msra.mxu0 0.0
      %1807 = vmatpush.msra.mxu0 0.0
      %1808 = vmatpush.msra.mxu0 0.0
      %1809 = vmatpush.msra.mxu0 0.0
      %1810 = vmatpush.msra.mxu0 0.0
      %1811 = vmatpush.msra.mxu0 0.0
      %1812 = vmatpush.msra.mxu0 0.0
      %1813 = vmatpush.msra.mxu0 0.0
      %1814 = vmatpush.msra.mxu0 0.0
      %1815 = vmatpush.msra.mxu0 0.0
      %1816 = vmatpush.msra.mxu0 0.0
      %1817 = vmatpush.msra.mxu0 %v1800
      %1818 = vmatmul.f32.gmra.mxu0 %v1704
      %v1819 = vpop.f32.mrf.mxu0
      %v1820 = vadd.f32 0.0, %v1819
      %1821 = vmatmul.f32.gmra.mxu0 %v1707
      %v1822 = vpop.f32.mrf.mxu0
      %v1823 = vadd.f32 0.0, %v1822
      %1824 = vmatmul.f32.gmra.mxu0 %v1710
      %v1825 = vpop.f32.mrf.mxu0
      %v1826 = vadd.f32 0.0, %v1825
      %1827 = vmatmul.f32.gmra.mxu0 %v1713
      %v1828 = vpop.f32.mrf.mxu0
      %v1829 = vadd.f32 0.0, %v1828
      %1830 = vmatmul.f32.gmra.mxu0 %v1716
      %v1831 = vpop.f32.mrf.mxu0
      %v1832 = vadd.f32 0.0, %v1831
      %1833 = vmatmul.f32.gmra.mxu0 %v1719
      %v1834 = vpop.f32.mrf.mxu0
      %v1835 = vadd.f32 0.0, %v1834
      %1836 = vmatmul.f32.gmra.mxu0 %v1722
      %v1837 = vpop.f32.mrf.mxu0
      %v1838 = vadd.f32 0.0, %v1837
      %1839 = vmatmul.f32.gmra.mxu0 %v1725
      %v1840 = vpop.f32.mrf.mxu0
      %v1841 = vadd.f32 0.0, %v1840
      %1842 = vmatmul.f32.gmra.mxu0 %v1728
      %v1843 = vpop.f32.mrf.mxu0
      %v1844 = vadd.f32 0.0, %v1843
      %1845 = vmatmul.f32.gmra.mxu0 %v1731
      %v1846 = vpop.f32.mrf.mxu0
      %v1847 = vadd.f32 0.0, %v1846
      %1848 = vmatmul.f32.gmra.mxu0 %v1734
      %v1849 = vpop.f32.mrf.mxu0
      %v1850 = vadd.f32 0.0, %v1849
      %1851 = vmatmul.f32.gmra.mxu0 %v1737
      %v1852 = vpop.f32.mrf.mxu0
      %v1853 = vadd.f32 0.0, %v1852
      %1854 = vmatmul.f32.gmra.mxu0 %v1740
      %v1855 = vpop.f32.mrf.mxu0
      %v1856 = vadd.f32 0.0, %v1855
      %1857 = vmatmul.f32.gmra.mxu0 %v1743
      %v1858 = vpop.f32.mrf.mxu0
      %v1859 = vadd.f32 0.0, %v1858
      %1860 = vmatmul.f32.gmra.mxu0 %v1746
      %v1861 = vpop.f32.mrf.mxu0
      %v1862 = vadd.f32 0.0, %v1861
      %1863 = vmatmul.f32.gmra.mxu0 %v1749
      %v1864 = vpop.f32.mrf.mxu0
      %v1865 = vadd.f32 0.0, %v1864
      %1866 = vmatmul.f32.gmra.mxu0 %v1752
      %v1867 = vpop.f32.mrf.mxu0
      %v1868 = vadd.f32 0.0, %v1867
      %1869 = vmatmul.f32.gmra.mxu0 %v1755
      %v1870 = vpop.f32.mrf.mxu0
      %v1871 = vadd.f32 0.0, %v1870
      %1872 = vmatmul.f32.gmra.mxu0 %v1758
      %v1873 = vpop.f32.mrf.mxu0
      %v1874 = vadd.f32 0.0, %v1873
      %1875 = vmatmul.f32.gmra.mxu0 %v1761
      %v1876 = vpop.f32.mrf.mxu0
      %v1877 = vadd.f32 0.0, %v1876
      %1878 = vmatmul.f32.gmra.mxu0 %v1764
      %v1879 = vpop.f32.mrf.mxu0
      %v1880 = vadd.f32 0.0, %v1879
      %1881 = vmatmul.f32.gmra.mxu0 %v1767
      %v1882 = vpop.f32.mrf.mxu0
      %v1883 = vadd.f32 0.0, %v1882
      %1884 = vmatmul.f32.gmra.mxu0 %v1770
      %v1885 = vpop.f32.mrf.mxu0
      %v1886 = vadd.f32 0.0, %v1885
      %1887 = vmatmul.f32.gmra.mxu0 %v1773
      %v1888 = vpop.f32.mrf.mxu0
      %v1889 = vadd.f32 0.0, %v1888
      %1890 = vmatmul.f32.gmra.mxu0 %v1776
      %v1891 = vpop.f32.mrf.mxu0
      %v1892 = vadd.f32 0.0, %v1891
      %1893 = vmatmul.f32.gmra.mxu0 %v1779
      %v1894 = vpop.f32.mrf.mxu0
      %v1895 = vadd.f32 0.0, %v1894
      %1896 = vmatmul.f32.gmra.mxu0 %v1782
      %v1897 = vpop.f32.mrf.mxu0
      %v1898 = vadd.f32 0.0, %v1897
      %1899 = vmatmul.f32.gmra.mxu0 %v1785
      %v1900 = vpop.f32.mrf.mxu0
      %v1901 = vadd.f32 0.0, %v1900
      %1902 = vmatmul.f32.gmra.mxu0 %v1788
      %v1903 = vpop.f32.mrf.mxu0
      %v1904 = vadd.f32 0.0, %v1903
      %1905 = vmatmul.f32.gmra.mxu0 %v1791
      %v1906 = vpop.f32.mrf.mxu0
      %v1907 = vadd.f32 0.0, %v1906
      %1908 = vmatmul.f32.gmra.mxu0 %v1794
      %v1909 = vpop.f32.mrf.mxu0
      %v1910 = vadd.f32 0.0, %v1909
      %1911 = vmatmul.f32.gmra.mxu0 %v1797
      %v1912 = vpop.f32.mrf.mxu0
      %v1913 = vadd.f32 0.0, %v1912
      %1914 = vdwg.mxu0
      %v1915 = vadd.f32 %v1637, %v1820
      %v1916 = vadd.f32 %v1638, %v1823
      %v1917 = vadd.f32 %v1639, %v1826
      %v1918 = vadd.f32 %v1640, %v1829
      %v1919 = vadd.f32 %v1641, %v1832
      %v1920 = vadd.f32 %v1642, %v1835
      %v1921 = vadd.f32 %v1643, %v1838
      %v1922 = vadd.f32 %v1644, %v1841
      %v1923 = vadd.f32 %v1645, %v1844
      %v1924 = vadd.f32 %v1646, %v1847
      %v1925 = vadd.f32 %v1647, %v1850
      %v1926 = vadd.f32 %v1648, %v1853
      %v1927 = vadd.f32 %v1649, %v1856
      %v1928 = vadd.f32 %v1650, %v1859
      %v1929 = vadd.f32 %v1651, %v1862
      %v1930 = vadd.f32 %v1652, %v1865
      %v1931 = vadd.f32 %v1653, %v1868
      %v1932 = vadd.f32 %v1654, %v1871
      %v1933 = vadd.f32 %v1655, %v1874
      %v1934 = vadd.f32 %v1656, %v1877
      %v1935 = vadd.f32 %v1657, %v1880
      %v1936 = vadd.f32 %v1658, %v1883
      %v1937 = vadd.f32 %v1659, %v1886
      %v1938 = vadd.f32 %v1660, %v1889
      %v1939 = vadd.f32 %v1661, %v1892
      %v1940 = vadd.f32 %v1662, %v1895
      %v1941 = vadd.f32 %v1663, %v1898
      %v1942 = vadd.f32 %v1664, %v1901
      %v1943 = vadd.f32 %v1665, %v1904
      %v1944 = vadd.f32 %v1666, %v1907
      %v1945 = vadd.f32 %v1667, %v1910
      %v1946 = vadd.f32 %v1668, %v1913
      %s1947 = scalar_lea.vmem [#allocation2], 48
      %v1948 = vld [vmem:[%s1947] sm:$0xff]
      %v1949 = vld [vmem:[%s1947 + $0x8] sm:$0xff]
      %v1950 = vld [vmem:[%s1947 + $0x18] sm:$0xff]
      %v1951 = vld [vmem:[%s1947 + $0x20] sm:$0xff]
      %v1952 = vld [vmem:[%s1947 + $0x30] sm:$0xff]
      %v1953 = vld [vmem:[%s1947 + $0x38] sm:$0xff]
      %v1954 = vld [vmem:[%s1947 + $0x48] sm:$0xff]
      %v1955 = vld [vmem:[%s1947 + $0x50] sm:$0xff]
      %v1956 = vld [vmem:[%s1947 + $0x60] sm:$0xff]
      %v1957 = vld [vmem:[%s1947 + $0x68] sm:$0xff]
      %v1958 = vld [vmem:[%s1947 + $0x78] sm:$0xff]
      %v1959 = vld [vmem:[%s1947 + $0x80] sm:$0xff]
      %v1960 = vld [vmem:[%s1947 + $0x90] sm:$0xff]
      %v1961 = vld [vmem:[%s1947 + $0x98] sm:$0xff]
      %v1962 = vld [vmem:[%s1947 + $0xa8] sm:$0xff]
      %v1963 = vld [vmem:[%s1947 + $0xb0] sm:$0xff]
      %v1964 = vld [vmem:[%s1947 + $0xc0] sm:$0xff]
      %v1965 = vld [vmem:[%s1947 + $0xc8] sm:$0xff]
      %v1966 = vld [vmem:[%s1947 + $0xd8] sm:$0xff]
      %v1967 = vld [vmem:[%s1947 + $0xe0] sm:$0xff]
      %v1968 = vld [vmem:[%s1947 + $0xf0] sm:$0xff]
      %v1969 = vld [vmem:[%s1947 + $0xf8] sm:$0xff]
      %v1970 = vld [vmem:[%s1947 + $0x108] sm:$0xff]
      %v1971 = vld [vmem:[%s1947 + $0x110] sm:$0xff]
      %v1972 = vld [vmem:[%s1947 + $0x120] sm:$0xff]
      %v1973 = vld [vmem:[%s1947 + $0x128] sm:$0xff]
      %v1974 = vld [vmem:[%s1947 + $0x138] sm:$0xff]
      %v1975 = vld [vmem:[%s1947 + $0x140] sm:$0xff]
      %v1976 = vld [vmem:[%s1947 + $0x150] sm:$0xff]
      %v1977 = vld [vmem:[%s1947 + $0x158] sm:$0xff]
      %v1978 = vld [vmem:[%s1947 + $0x168] sm:$0xff]
      %v1979 = vld [vmem:[%s1947 + $0x170] sm:$0xff]
      %s1980 = scalar_lea.vmem %s1, 24
      %v1981 = vld [vmem:[%s1980] sm:$0xf]
      %v1983 = vsel %vm197, %v1948, 0
      %v1986 = vsel %vm197, %v1949, 0
      %v1989 = vsel %vm197, %v1950, 0
      %v1992 = vsel %vm197, %v1951, 0
      %v1995 = vsel %vm197, %v1952, 0
      %v1998 = vsel %vm197, %v1953, 0
      %v2001 = vsel %vm197, %v1954, 0
      %v2004 = vsel %vm197, %v1955, 0
      %v2007 = vsel %vm197, %v1956, 0
      %v2010 = vsel %vm197, %v1957, 0
      %v2013 = vsel %vm197, %v1958, 0
      %v2016 = vsel %vm197, %v1959, 0
      %v2019 = vsel %vm197, %v1960, 0
      %v2022 = vsel %vm197, %v1961, 0
      %v2025 = vsel %vm197, %v1962, 0
      %v2028 = vsel %vm197, %v1963, 0
      %v2031 = vsel %vm197, %v1964, 0
      %v2034 = vsel %vm197, %v1965, 0
      %v2037 = vsel %vm197, %v1966, 0
      %v2040 = vsel %vm197, %v1967, 0
      %v2043 = vsel %vm197, %v1968, 0
      %v2046 = vsel %vm197, %v1969, 0
      %v2049 = vsel %vm197, %v1970, 0
      %v2052 = vsel %vm197, %v1971, 0
      %v2055 = vsel %vm197, %v1972, 0
      %v2058 = vsel %vm197, %v1973, 0
      %v2061 = vsel %vm197, %v1974, 0
      %v2064 = vsel %vm197, %v1975, 0
      %v2067 = vsel %vm197, %v1976, 0
      %v2070 = vsel %vm197, %v1977, 0
      %v2073 = vsel %vm197, %v1978, 0
      %v2076 = vsel %vm197, %v1979, 0
      %v2079 = vsel %vm506, %v1981, 0
      %2081 = vmatpush.msra.mxu0 0.0
      %2082 = vmatpush.msra.mxu0 0.0
      %2083 = vmatpush.msra.mxu0 0.0
      %2084 = vmatpush.msra.mxu0 0.0
      %2085 = vmatpush.msra.mxu0 0.0
      %2086 = vmatpush.msra.mxu0 0.0
      %2087 = vmatpush.msra.mxu0 0.0
      %2088 = vmatpush.msra.mxu0 0.0
      %2089 = vmatpush.msra.mxu0 0.0
      %2090 = vmatpush.msra.mxu0 0.0
      %2091 = vmatpush.msra.mxu0 0.0
      %2092 = vmatpush.msra.mxu0 0.0
      %2093 = vmatpush.msra.mxu0 0.0
      %2094 = vmatpush.msra.mxu0 0.0
      %2095 = vmatpush.msra.mxu0 0.0
      %2096 = vmatpush.msra.mxu0 %v2079
      %2097 = vmatmul.f32.gmra.mxu0 %v1983
      %v2098 = vpop.f32.mrf.mxu0
      %v2099 = vadd.f32 0.0, %v2098
      %2100 = vmatmul.f32.gmra.mxu0 %v1986
      %v2101 = vpop.f32.mrf.mxu0
      %v2102 = vadd.f32 0.0, %v2101
      %2103 = vmatmul.f32.gmra.mxu0 %v1989
      %v2104 = vpop.f32.mrf.mxu0
      %v2105 = vadd.f32 0.0, %v2104
      %2106 = vmatmul.f32.gmra.mxu0 %v1992
      %v2107 = vpop.f32.mrf.mxu0
      %v2108 = vadd.f32 0.0, %v2107
      %2109 = vmatmul.f32.gmra.mxu0 %v1995
      %v2110 = vpop.f32.mrf.mxu0
      %v2111 = vadd.f32 0.0, %v2110
      %2112 = vmatmul.f32.gmra.mxu0 %v1998
      %v2113 = vpop.f32.mrf.mxu0
      %v2114 = vadd.f32 0.0, %v2113
      %2115 = vmatmul.f32.gmra.mxu0 %v2001
      %v2116 = vpop.f32.mrf.mxu0
      %v2117 = vadd.f32 0.0, %v2116
      %2118 = vmatmul.f32.gmra.mxu0 %v2004
      %v2119 = vpop.f32.mrf.mxu0
      %v2120 = vadd.f32 0.0, %v2119
      %2121 = vmatmul.f32.gmra.mxu0 %v2007
      %v2122 = vpop.f32.mrf.mxu0
      %v2123 = vadd.f32 0.0, %v2122
      %2124 = vmatmul.f32.gmra.mxu0 %v2010
      %v2125 = vpop.f32.mrf.mxu0
      %v2126 = vadd.f32 0.0, %v2125
      %2127 = vmatmul.f32.gmra.mxu0 %v2013
      %v2128 = vpop.f32.mrf.mxu0
      %v2129 = vadd.f32 0.0, %v2128
      %2130 = vmatmul.f32.gmra.mxu0 %v2016
      %v2131 = vpop.f32.mrf.mxu0
      %v2132 = vadd.f32 0.0, %v2131
      %2133 = vmatmul.f32.gmra.mxu0 %v2019
      %v2134 = vpop.f32.mrf.mxu0
      %v2135 = vadd.f32 0.0, %v2134
      %2136 = vmatmul.f32.gmra.mxu0 %v2022
      %v2137 = vpop.f32.mrf.mxu0
      %v2138 = vadd.f32 0.0, %v2137
      %2139 = vmatmul.f32.gmra.mxu0 %v2025
      %v2140 = vpop.f32.mrf.mxu0
      %v2141 = vadd.f32 0.0, %v2140
      %2142 = vmatmul.f32.gmra.mxu0 %v2028
      %v2143 = vpop.f32.mrf.mxu0
      %v2144 = vadd.f32 0.0, %v2143
      %2145 = vmatmul.f32.gmra.mxu0 %v2031
      %v2146 = vpop.f32.mrf.mxu0
      %v2147 = vadd.f32 0.0, %v2146
      %2148 = vmatmul.f32.gmra.mxu0 %v2034
      %v2149 = vpop.f32.mrf.mxu0
      %v2150 = vadd.f32 0.0, %v2149
      %2151 = vmatmul.f32.gmra.mxu0 %v2037
      %v2152 = vpop.f32.mrf.mxu0
      %v2153 = vadd.f32 0.0, %v2152
      %2154 = vmatmul.f32.gmra.mxu0 %v2040
      %v2155 = vpop.f32.mrf.mxu0
      %v2156 = vadd.f32 0.0, %v2155
      %2157 = vmatmul.f32.gmra.mxu0 %v2043
      %v2158 = vpop.f32.mrf.mxu0
      %v2159 = vadd.f32 0.0, %v2158
      %2160 = vmatmul.f32.gmra.mxu0 %v2046
      %v2161 = vpop.f32.mrf.mxu0
      %v2162 = vadd.f32 0.0, %v2161
      %2163 = vmatmul.f32.gmra.mxu0 %v2049
      %v2164 = vpop.f32.mrf.mxu0
      %v2165 = vadd.f32 0.0, %v2164
      %2166 = vmatmul.f32.gmra.mxu0 %v2052
      %v2167 = vpop.f32.mrf.mxu0
      %v2168 = vadd.f32 0.0, %v2167
      %2169 = vmatmul.f32.gmra.mxu0 %v2055
      %v2170 = vpop.f32.mrf.mxu0
      %v2171 = vadd.f32 0.0, %v2170
      %2172 = vmatmul.f32.gmra.mxu0 %v2058
      %v2173 = vpop.f32.mrf.mxu0
      %v2174 = vadd.f32 0.0, %v2173
      %2175 = vmatmul.f32.gmra.mxu0 %v2061
      %v2176 = vpop.f32.mrf.mxu0
      %v2177 = vadd.f32 0.0, %v2176
      %2178 = vmatmul.f32.gmra.mxu0 %v2064
      %v2179 = vpop.f32.mrf.mxu0
      %v2180 = vadd.f32 0.0, %v2179
      %2181 = vmatmul.f32.gmra.mxu0 %v2067
      %v2182 = vpop.f32.mrf.mxu0
      %v2183 = vadd.f32 0.0, %v2182
      %2184 = vmatmul.f32.gmra.mxu0 %v2070
      %v2185 = vpop.f32.mrf.mxu0
      %v2186 = vadd.f32 0.0, %v2185
      %2187 = vmatmul.f32.gmra.mxu0 %v2073
      %v2188 = vpop.f32.mrf.mxu0
      %v2189 = vadd.f32 0.0, %v2188
      %2190 = vmatmul.f32.gmra.mxu0 %v2076
      %v2191 = vpop.f32.mrf.mxu0
      %v2192 = vadd.f32 0.0, %v2191
      %2193 = vdwg.mxu0
      %v2194 = vadd.f32 %v1915, %v2099
      %v2195 = vadd.f32 %v1916, %v2102
      %v2196 = vadd.f32 %v1917, %v2105
      %v2197 = vadd.f32 %v1918, %v2108
      %v2198 = vadd.f32 %v1919, %v2111
      %v2199 = vadd.f32 %v1920, %v2114
      %v2200 = vadd.f32 %v1921, %v2117
      %v2201 = vadd.f32 %v1922, %v2120
      %v2202 = vadd.f32 %v1923, %v2123
      %v2203 = vadd.f32 %v1924, %v2126
      %v2204 = vadd.f32 %v1925, %v2129
      %v2205 = vadd.f32 %v1926, %v2132
      %v2206 = vadd.f32 %v1927, %v2135
      %v2207 = vadd.f32 %v1928, %v2138
      %v2208 = vadd.f32 %v1929, %v2141
      %v2209 = vadd.f32 %v1930, %v2144
      %v2210 = vadd.f32 %v1931, %v2147
      %v2211 = vadd.f32 %v1932, %v2150
      %v2212 = vadd.f32 %v1933, %v2153
      %v2213 = vadd.f32 %v1934, %v2156
      %v2214 = vadd.f32 %v1935, %v2159
      %v2215 = vadd.f32 %v1936, %v2162
      %v2216 = vadd.f32 %v1937, %v2165
      %v2217 = vadd.f32 %v1938, %v2168
      %v2218 = vadd.f32 %v1939, %v2171
      %v2219 = vadd.f32 %v1940, %v2174
      %v2220 = vadd.f32 %v1941, %v2177
      %v2221 = vadd.f32 %v1942, %v2180
      %v2222 = vadd.f32 %v1943, %v2183
      %v2223 = vadd.f32 %v1944, %v2186
      %v2224 = vadd.f32 %v1945, %v2189
      %v2225 = vadd.f32 %v1946, %v2192
      %v2226 = vld [vmem:[%s1947 + $0x1] sm:$0xff]
      %v2227 = vld [vmem:[%s1947 + $0x9] sm:$0xff]
      %v2228 = vld [vmem:[%s1947 + $0x19] sm:$0xff]
      %v2229 = vld [vmem:[%s1947 + $0x21] sm:$0xff]
      %v2230 = vld [vmem:[%s1947 + $0x31] sm:$0xff]
      %v2231 = vld [vmem:[%s1947 + $0x39] sm:$0xff]
      %v2232 = vld [vmem:[%s1947 + $0x49] sm:$0xff]
      %v2233 = vld [vmem:[%s1947 + $0x51] sm:$0xff]
      %v2234 = vld [vmem:[%s1947 + $0x61] sm:$0xff]
      %v2235 = vld [vmem:[%s1947 + $0x69] sm:$0xff]
      %v2236 = vld [vmem:[%s1947 + $0x79] sm:$0xff]
      %v2237 = vld [vmem:[%s1947 + $0x81] sm:$0xff]
      %v2238 = vld [vmem:[%s1947 + $0x91] sm:$0xff]
      %v2239 = vld [vmem:[%s1947 + $0x99] sm:$0xff]
      %v2240 = vld [vmem:[%s1947 + $0xa9] sm:$0xff]
      %v2241 = vld [vmem:[%s1947 + $0xb1] sm:$0xff]
      %v2242 = vld [vmem:[%s1947 + $0xc1] sm:$0xff]
      %v2243 = vld [vmem:[%s1947 + $0xc9] sm:$0xff]
      %v2244 = vld [vmem:[%s1947 + $0xd9] sm:$0xff]
      %v2245 = vld [vmem:[%s1947 + $0xe1] sm:$0xff]
      %v2246 = vld [vmem:[%s1947 + $0xf1] sm:$0xff]
      %v2247 = vld [vmem:[%s1947 + $0xf9] sm:$0xff]
      %v2248 = vld [vmem:[%s1947 + $0x109] sm:$0xff]
      %v2249 = vld [vmem:[%s1947 + $0x111] sm:$0xff]
      %v2250 = vld [vmem:[%s1947 + $0x121] sm:$0xff]
      %v2251 = vld [vmem:[%s1947 + $0x129] sm:$0xff]
      %v2252 = vld [vmem:[%s1947 + $0x139] sm:$0xff]
      %v2253 = vld [vmem:[%s1947 + $0x141] sm:$0xff]
      %v2254 = vld [vmem:[%s1947 + $0x151] sm:$0xff]
      %v2255 = vld [vmem:[%s1947 + $0x159] sm:$0xff]
      %v2256 = vld [vmem:[%s1947 + $0x169] sm:$0xff]
      %v2257 = vld [vmem:[%s1947 + $0x171] sm:$0xff]
      %s2258 = scalar_lea.vmem %s1, 28
      %v2259 = vld [vmem:[%s2258] sm:$0xf]
      %v2261 = vsel %vm197, %v2226, 0
      %v2264 = vsel %vm197, %v2227, 0
      %v2267 = vsel %vm197, %v2228, 0
      %v2270 = vsel %vm197, %v2229, 0
      %v2273 = vsel %vm197, %v2230, 0
      %v2276 = vsel %vm197, %v2231, 0
      %v2279 = vsel %vm197, %v2232, 0
      %v2282 = vsel %vm197, %v2233, 0
      %v2285 = vsel %vm197, %v2234, 0
      %v2288 = vsel %vm197, %v2235, 0
      %v2291 = vsel %vm197, %v2236, 0
      %v2294 = vsel %vm197, %v2237, 0
      %v2297 = vsel %vm197, %v2238, 0
      %v2300 = vsel %vm197, %v2239, 0
      %v2303 = vsel %vm197, %v2240, 0
      %v2306 = vsel %vm197, %v2241, 0
      %v2309 = vsel %vm197, %v2242, 0
      %v2312 = vsel %vm197, %v2243, 0
      %v2315 = vsel %vm197, %v2244, 0
      %v2318 = vsel %vm197, %v2245, 0
      %v2321 = vsel %vm197, %v2246, 0
      %v2324 = vsel %vm197, %v2247, 0
      %v2327 = vsel %vm197, %v2248, 0
      %v2330 = vsel %vm197, %v2249, 0
      %v2333 = vsel %vm197, %v2250, 0
      %v2336 = vsel %vm197, %v2251, 0
      %v2339 = vsel %vm197, %v2252, 0
      %v2342 = vsel %vm197, %v2253, 0
      %v2345 = vsel %vm197, %v2254, 0
      %v2348 = vsel %vm197, %v2255, 0
      %v2351 = vsel %vm197, %v2256, 0
      %v2354 = vsel %vm197, %v2257, 0
      %v2357 = vsel %vm506, %v2259, 0
      %2359 = vmatpush.msra.mxu0 0.0
      %2360 = vmatpush.msra.mxu0 0.0
      %2361 = vmatpush.msra.mxu0 0.0
      %2362 = vmatpush.msra.mxu0 0.0
      %2363 = vmatpush.msra.mxu0 0.0
      %2364 = vmatpush.msra.mxu0 0.0
      %2365 = vmatpush.msra.mxu0 0.0
      %2366 = vmatpush.msra.mxu0 0.0
      %2367 = vmatpush.msra.mxu0 0.0
      %2368 = vmatpush.msra.mxu0 0.0
      %2369 = vmatpush.msra.mxu0 0.0
      %2370 = vmatpush.msra.mxu0 0.0
      %2371 = vmatpush.msra.mxu0 0.0
      %2372 = vmatpush.msra.mxu0 0.0
      %2373 = vmatpush.msra.mxu0 0.0
      %2374 = vmatpush.msra.mxu0 %v2357
      %2375 = vmatmul.f32.gmra.mxu0 %v2261
      %v2376 = vpop.f32.mrf.mxu0
      %v2377 = vadd.f32 0.0, %v2376
      %2378 = vmatmul.f32.gmra.mxu0 %v2264
      %v2379 = vpop.f32.mrf.mxu0
      %v2380 = vadd.f32 0.0, %v2379
      %2381 = vmatmul.f32.gmra.mxu0 %v2267
      %v2382 = vpop.f32.mrf.mxu0
      %v2383 = vadd.f32 0.0, %v2382
      %2384 = vmatmul.f32.gmra.mxu0 %v2270
      %v2385 = vpop.f32.mrf.mxu0
      %v2386 = vadd.f32 0.0, %v2385
      %2387 = vmatmul.f32.gmra.mxu0 %v2273
      %v2388 = vpop.f32.mrf.mxu0
      %v2389 = vadd.f32 0.0, %v2388
      %2390 = vmatmul.f32.gmra.mxu0 %v2276
      %v2391 = vpop.f32.mrf.mxu0
      %v2392 = vadd.f32 0.0, %v2391
      %2393 = vmatmul.f32.gmra.mxu0 %v2279
      %v2394 = vpop.f32.mrf.mxu0
      %v2395 = vadd.f32 0.0, %v2394
      %2396 = vmatmul.f32.gmra.mxu0 %v2282
      %v2397 = vpop.f32.mrf.mxu0
      %v2398 = vadd.f32 0.0, %v2397
      %2399 = vmatmul.f32.gmra.mxu0 %v2285
      %v2400 = vpop.f32.mrf.mxu0
      %v2401 = vadd.f32 0.0, %v2400
      %2402 = vmatmul.f32.gmra.mxu0 %v2288
      %v2403 = vpop.f32.mrf.mxu0
      %v2404 = vadd.f32 0.0, %v2403
      %2405 = vmatmul.f32.gmra.mxu0 %v2291
      %v2406 = vpop.f32.mrf.mxu0
      %v2407 = vadd.f32 0.0, %v2406
      %2408 = vmatmul.f32.gmra.mxu0 %v2294
      %v2409 = vpop.f32.mrf.mxu0
      %v2410 = vadd.f32 0.0, %v2409
      %2411 = vmatmul.f32.gmra.mxu0 %v2297
      %v2412 = vpop.f32.mrf.mxu0
      %v2413 = vadd.f32 0.0, %v2412
      %2414 = vmatmul.f32.gmra.mxu0 %v2300
      %v2415 = vpop.f32.mrf.mxu0
      %v2416 = vadd.f32 0.0, %v2415
      %2417 = vmatmul.f32.gmra.mxu0 %v2303
      %v2418 = vpop.f32.mrf.mxu0
      %v2419 = vadd.f32 0.0, %v2418
      %2420 = vmatmul.f32.gmra.mxu0 %v2306
      %v2421 = vpop.f32.mrf.mxu0
      %v2422 = vadd.f32 0.0, %v2421
      %2423 = vmatmul.f32.gmra.mxu0 %v2309
      %v2424 = vpop.f32.mrf.mxu0
      %v2425 = vadd.f32 0.0, %v2424
      %2426 = vmatmul.f32.gmra.mxu0 %v2312
      %v2427 = vpop.f32.mrf.mxu0
      %v2428 = vadd.f32 0.0, %v2427
      %2429 = vmatmul.f32.gmra.mxu0 %v2315
      %v2430 = vpop.f32.mrf.mxu0
      %v2431 = vadd.f32 0.0, %v2430
      %2432 = vmatmul.f32.gmra.mxu0 %v2318
      %v2433 = vpop.f32.mrf.mxu0
      %v2434 = vadd.f32 0.0, %v2433
      %2435 = vmatmul.f32.gmra.mxu0 %v2321
      %v2436 = vpop.f32.mrf.mxu0
      %v2437 = vadd.f32 0.0, %v2436
      %2438 = vmatmul.f32.gmra.mxu0 %v2324
      %v2439 = vpop.f32.mrf.mxu0
      %v2440 = vadd.f32 0.0, %v2439
      %2441 = vmatmul.f32.gmra.mxu0 %v2327
      %v2442 = vpop.f32.mrf.mxu0
      %v2443 = vadd.f32 0.0, %v2442
      %2444 = vmatmul.f32.gmra.mxu0 %v2330
      %v2445 = vpop.f32.mrf.mxu0
      %v2446 = vadd.f32 0.0, %v2445
      %2447 = vmatmul.f32.gmra.mxu0 %v2333
      %v2448 = vpop.f32.mrf.mxu0
      %v2449 = vadd.f32 0.0, %v2448
      %2450 = vmatmul.f32.gmra.mxu0 %v2336
      %v2451 = vpop.f32.mrf.mxu0
      %v2452 = vadd.f32 0.0, %v2451
      %2453 = vmatmul.f32.gmra.mxu0 %v2339
      %v2454 = vpop.f32.mrf.mxu0
      %v2455 = vadd.f32 0.0, %v2454
      %2456 = vmatmul.f32.gmra.mxu0 %v2342
      %v2457 = vpop.f32.mrf.mxu0
      %v2458 = vadd.f32 0.0, %v2457
      %2459 = vmatmul.f32.gmra.mxu0 %v2345
      %v2460 = vpop.f32.mrf.mxu0
      %v2461 = vadd.f32 0.0, %v2460
      %2462 = vmatmul.f32.gmra.mxu0 %v2348
      %v2463 = vpop.f32.mrf.mxu0
      %v2464 = vadd.f32 0.0, %v2463
      %2465 = vmatmul.f32.gmra.mxu0 %v2351
      %v2466 = vpop.f32.mrf.mxu0
      %v2467 = vadd.f32 0.0, %v2466
      %2468 = vmatmul.f32.gmra.mxu0 %v2354
      %v2469 = vpop.f32.mrf.mxu0
      %v2470 = vadd.f32 0.0, %v2469
      %2471 = vdwg.mxu0
      %v2472 = vadd.f32 %v2194, %v2377
      %v2473 = vadd.f32 %v2195, %v2380
      %v2474 = vadd.f32 %v2196, %v2383
      %v2475 = vadd.f32 %v2197, %v2386
      %v2476 = vadd.f32 %v2198, %v2389
      %v2477 = vadd.f32 %v2199, %v2392
      %v2478 = vadd.f32 %v2200, %v2395
      %v2479 = vadd.f32 %v2201, %v2398
      %v2480 = vadd.f32 %v2202, %v2401
      %v2481 = vadd.f32 %v2203, %v2404
      %v2482 = vadd.f32 %v2204, %v2407
      %v2483 = vadd.f32 %v2205, %v2410
      %v2484 = vadd.f32 %v2206, %v2413
      %v2485 = vadd.f32 %v2207, %v2416
      %v2486 = vadd.f32 %v2208, %v2419
      %v2487 = vadd.f32 %v2209, %v2422
      %v2488 = vadd.f32 %v2210, %v2425
      %v2489 = vadd.f32 %v2211, %v2428
      %v2490 = vadd.f32 %v2212, %v2431
      %v2491 = vadd.f32 %v2213, %v2434
      %v2492 = vadd.f32 %v2214, %v2437
      %v2493 = vadd.f32 %v2215, %v2440
      %v2494 = vadd.f32 %v2216, %v2443
      %v2495 = vadd.f32 %v2217, %v2446
      %v2496 = vadd.f32 %v2218, %v2449
      %v2497 = vadd.f32 %v2219, %v2452
      %v2498 = vadd.f32 %v2220, %v2455
      %v2499 = vadd.f32 %v2221, %v2458
      %v2500 = vadd.f32 %v2222, %v2461
      %v2501 = vadd.f32 %v2223, %v2464
      %v2502 = vadd.f32 %v2224, %v2467
      %v2503 = vadd.f32 %v2225, %v2470
      %v2504 = vld [vmem:[%s1947 + $0x2] sm:$0xff]
      %v2505 = vld [vmem:[%s1947 + $0xa] sm:$0xff]
      %v2506 = vld [vmem:[%s1947 + $0x1a] sm:$0xff]
      %v2507 = vld [vmem:[%s1947 + $0x22] sm:$0xff]
      %v2508 = vld [vmem:[%s1947 + $0x32] sm:$0xff]
      %v2509 = vld [vmem:[%s1947 + $0x3a] sm:$0xff]
      %v2510 = vld [vmem:[%s1947 + $0x4a] sm:$0xff]
      %v2511 = vld [vmem:[%s1947 + $0x52] sm:$0xff]
      %v2512 = vld [vmem:[%s1947 + $0x62] sm:$0xff]
      %v2513 = vld [vmem:[%s1947 + $0x6a] sm:$0xff]
      %v2514 = vld [vmem:[%s1947 + $0x7a] sm:$0xff]
      %v2515 = vld [vmem:[%s1947 + $0x82] sm:$0xff]
      %v2516 = vld [vmem:[%s1947 + $0x92] sm:$0xff]
      %v2517 = vld [vmem:[%s1947 + $0x9a] sm:$0xff]
      %v2518 = vld [vmem:[%s1947 + $0xaa] sm:$0xff]
      %v2519 = vld [vmem:[%s1947 + $0xb2] sm:$0xff]
      %v2520 = vld [vmem:[%s1947 + $0xc2] sm:$0xff]
      %v2521 = vld [vmem:[%s1947 + $0xca] sm:$0xff]
      %v2522 = vld [vmem:[%s1947 + $0xda] sm:$0xff]
      %v2523 = vld [vmem:[%s1947 + $0xe2] sm:$0xff]
      %v2524 = vld [vmem:[%s1947 + $0xf2] sm:$0xff]
      %v2525 = vld [vmem:[%s1947 + $0xfa] sm:$0xff]
      %v2526 = vld [vmem:[%s1947 + $0x10a] sm:$0xff]
      %v2527 = vld [vmem:[%s1947 + $0x112] sm:$0xff]
      %v2528 = vld [vmem:[%s1947 + $0x122] sm:$0xff]
      %v2529 = vld [vmem:[%s1947 + $0x12a] sm:$0xff]
      %v2530 = vld [vmem:[%s1947 + $0x13a] sm:$0xff]
      %v2531 = vld [vmem:[%s1947 + $0x142] sm:$0xff]
      %v2532 = vld [vmem:[%s1947 + $0x152] sm:$0xff]
      %v2533 = vld [vmem:[%s1947 + $0x15a] sm:$0xff]
      %v2534 = vld [vmem:[%s1947 + $0x16a] sm:$0xff]
      %v2535 = vld [vmem:[%s1947 + $0x172] sm:$0xff]
      %s2536 = scalar_lea.vmem %s1, 32
      %v2537 = vld [vmem:[%s2536] sm:$0xf]
      %v2539 = vsel %vm197, %v2504, 0
      %v2542 = vsel %vm197, %v2505, 0
      %v2545 = vsel %vm197, %v2506, 0
      %v2548 = vsel %vm197, %v2507, 0
      %v2551 = vsel %vm197, %v2508, 0
      %v2554 = vsel %vm197, %v2509, 0
      %v2557 = vsel %vm197, %v2510, 0
      %v2560 = vsel %vm197, %v2511, 0
      %v2563 = vsel %vm197, %v2512, 0
      %v2566 = vsel %vm197, %v2513, 0
      %v2569 = vsel %vm197, %v2514, 0
      %v2572 = vsel %vm197, %v2515, 0
      %v2575 = vsel %vm197, %v2516, 0
      %v2578 = vsel %vm197, %v2517, 0
      %v2581 = vsel %vm197, %v2518, 0
      %v2584 = vsel %vm197, %v2519, 0
      %v2587 = vsel %vm197, %v2520, 0
      %v2590 = vsel %vm197, %v2521, 0
      %v2593 = vsel %vm197, %v2522, 0
      %v2596 = vsel %vm197, %v2523, 0
      %v2599 = vsel %vm197, %v2524, 0
      %v2602 = vsel %vm197, %v2525, 0
      %v2605 = vsel %vm197, %v2526, 0
      %v2608 = vsel %vm197, %v2527, 0
      %v2611 = vsel %vm197, %v2528, 0
      %v2614 = vsel %vm197, %v2529, 0
      %v2617 = vsel %vm197, %v2530, 0
      %v2620 = vsel %vm197, %v2531, 0
      %v2623 = vsel %vm197, %v2532, 0
      %v2626 = vsel %vm197, %v2533, 0
      %v2629 = vsel %vm197, %v2534, 0
      %v2632 = vsel %vm197, %v2535, 0
      %v2635 = vsel %vm506, %v2537, 0
      %2637 = vmatpush.msra.mxu0 0.0
      %2638 = vmatpush.msra.mxu0 0.0
      %2639 = vmatpush.msra.mxu0 0.0
      %2640 = vmatpush.msra.mxu0 0.0
      %2641 = vmatpush.msra.mxu0 0.0
      %2642 = vmatpush.msra.mxu0 0.0
      %2643 = vmatpush.msra.mxu0 0.0
      %2644 = vmatpush.msra.mxu0 0.0
      %2645 = vmatpush.msra.mxu0 0.0
      %2646 = vmatpush.msra.mxu0 0.0
      %2647 = vmatpush.msra.mxu0 0.0
      %2648 = vmatpush.msra.mxu0 0.0
      %2649 = vmatpush.msra.mxu0 0.0
      %2650 = vmatpush.msra.mxu0 0.0
      %2651 = vmatpush.msra.mxu0 0.0
      %2652 = vmatpush.msra.mxu0 %v2635
      %2653 = vmatmul.f32.gmra.mxu0 %v2539
      %v2654 = vpop.f32.mrf.mxu0
      %v2655 = vadd.f32 0.0, %v2654
      %2656 = vmatmul.f32.gmra.mxu0 %v2542
      %v2657 = vpop.f32.mrf.mxu0
      %v2658 = vadd.f32 0.0, %v2657
      %2659 = vmatmul.f32.gmra.mxu0 %v2545
      %v2660 = vpop.f32.mrf.mxu0
      %v2661 = vadd.f32 0.0, %v2660
      %2662 = vmatmul.f32.gmra.mxu0 %v2548
      %v2663 = vpop.f32.mrf.mxu0
      %v2664 = vadd.f32 0.0, %v2663
      %2665 = vmatmul.f32.gmra.mxu0 %v2551
      %v2666 = vpop.f32.mrf.mxu0
      %v2667 = vadd.f32 0.0, %v2666
      %2668 = vmatmul.f32.gmra.mxu0 %v2554
      %v2669 = vpop.f32.mrf.mxu0
      %v2670 = vadd.f32 0.0, %v2669
      %2671 = vmatmul.f32.gmra.mxu0 %v2557
      %v2672 = vpop.f32.mrf.mxu0
      %v2673 = vadd.f32 0.0, %v2672
      %2674 = vmatmul.f32.gmra.mxu0 %v2560
      %v2675 = vpop.f32.mrf.mxu0
      %v2676 = vadd.f32 0.0, %v2675
      %2677 = vmatmul.f32.gmra.mxu0 %v2563
      %v2678 = vpop.f32.mrf.mxu0
      %v2679 = vadd.f32 0.0, %v2678
      %2680 = vmatmul.f32.gmra.mxu0 %v2566
      %v2681 = vpop.f32.mrf.mxu0
      %v2682 = vadd.f32 0.0, %v2681
      %2683 = vmatmul.f32.gmra.mxu0 %v2569
      %v2684 = vpop.f32.mrf.mxu0
      %v2685 = vadd.f32 0.0, %v2684
      %2686 = vmatmul.f32.gmra.mxu0 %v2572
      %v2687 = vpop.f32.mrf.mxu0
      %v2688 = vadd.f32 0.0, %v2687
      %2689 = vmatmul.f32.gmra.mxu0 %v2575
      %v2690 = vpop.f32.mrf.mxu0
      %v2691 = vadd.f32 0.0, %v2690
      %2692 = vmatmul.f32.gmra.mxu0 %v2578
      %v2693 = vpop.f32.mrf.mxu0
      %v2694 = vadd.f32 0.0, %v2693
      %2695 = vmatmul.f32.gmra.mxu0 %v2581
      %v2696 = vpop.f32.mrf.mxu0
      %v2697 = vadd.f32 0.0, %v2696
      %2698 = vmatmul.f32.gmra.mxu0 %v2584
      %v2699 = vpop.f32.mrf.mxu0
      %v2700 = vadd.f32 0.0, %v2699
      %2701 = vmatmul.f32.gmra.mxu0 %v2587
      %v2702 = vpop.f32.mrf.mxu0
      %v2703 = vadd.f32 0.0, %v2702
      %2704 = vmatmul.f32.gmra.mxu0 %v2590
      %v2705 = vpop.f32.mrf.mxu0
      %v2706 = vadd.f32 0.0, %v2705
      %2707 = vmatmul.f32.gmra.mxu0 %v2593
      %v2708 = vpop.f32.mrf.mxu0
      %v2709 = vadd.f32 0.0, %v2708
      %2710 = vmatmul.f32.gmra.mxu0 %v2596
      %v2711 = vpop.f32.mrf.mxu0
      %v2712 = vadd.f32 0.0, %v2711
      %2713 = vmatmul.f32.gmra.mxu0 %v2599
      %v2714 = vpop.f32.mrf.mxu0
      %v2715 = vadd.f32 0.0, %v2714
      %2716 = vmatmul.f32.gmra.mxu0 %v2602
      %v2717 = vpop.f32.mrf.mxu0
      %v2718 = vadd.f32 0.0, %v2717
      %2719 = vmatmul.f32.gmra.mxu0 %v2605
      %v2720 = vpop.f32.mrf.mxu0
      %v2721 = vadd.f32 0.0, %v2720
      %2722 = vmatmul.f32.gmra.mxu0 %v2608
      %v2723 = vpop.f32.mrf.mxu0
      %v2724 = vadd.f32 0.0, %v2723
      %2725 = vmatmul.f32.gmra.mxu0 %v2611
      %v2726 = vpop.f32.mrf.mxu0
      %v2727 = vadd.f32 0.0, %v2726
      %2728 = vmatmul.f32.gmra.mxu0 %v2614
      %v2729 = vpop.f32.mrf.mxu0
      %v2730 = vadd.f32 0.0, %v2729
      %2731 = vmatmul.f32.gmra.mxu0 %v2617
      %v2732 = vpop.f32.mrf.mxu0
      %v2733 = vadd.f32 0.0, %v2732
      %2734 = vmatmul.f32.gmra.mxu0 %v2620
      %v2735 = vpop.f32.mrf.mxu0
      %v2736 = vadd.f32 0.0, %v2735
      %2737 = vmatmul.f32.gmra.mxu0 %v2623
      %v2738 = vpop.f32.mrf.mxu0
      %v2739 = vadd.f32 0.0, %v2738
      %2740 = vmatmul.f32.gmra.mxu0 %v2626
      %v2741 = vpop.f32.mrf.mxu0
      %v2742 = vadd.f32 0.0, %v2741
      %2743 = vmatmul.f32.gmra.mxu0 %v2629
      %v2744 = vpop.f32.mrf.mxu0
      %v2745 = vadd.f32 0.0, %v2744
      %2746 = vmatmul.f32.gmra.mxu0 %v2632
      %v2747 = vpop.f32.mrf.mxu0
      %v2748 = vadd.f32 0.0, %v2747
      %2749 = vdwg.mxu0
      %v2750 = vadd.f32 %v2472, %v2655
      %v2751 = vadd.f32 %v2473, %v2658
      %v2752 = vadd.f32 %v2474, %v2661
      %v2753 = vadd.f32 %v2475, %v2664
      %v2754 = vadd.f32 %v2476, %v2667
      %v2755 = vadd.f32 %v2477, %v2670
      %v2756 = vadd.f32 %v2478, %v2673
      %v2757 = vadd.f32 %v2479, %v2676
      %v2758 = vadd.f32 %v2480, %v2679
      %v2759 = vadd.f32 %v2481, %v2682
      %v2760 = vadd.f32 %v2482, %v2685
      %v2761 = vadd.f32 %v2483, %v2688
      %v2762 = vadd.f32 %v2484, %v2691
      %v2763 = vadd.f32 %v2485, %v2694
      %v2764 = vadd.f32 %v2486, %v2697
      %v2765 = vadd.f32 %v2487, %v2700
      %v2766 = vadd.f32 %v2488, %v2703
      %v2767 = vadd.f32 %v2489, %v2706
      %v2768 = vadd.f32 %v2490, %v2709
      %v2769 = vadd.f32 %v2491, %v2712
      %v2770 = vadd.f32 %v2492, %v2715
      %v2771 = vadd.f32 %v2493, %v2718
      %v2772 = vadd.f32 %v2494, %v2721
      %v2773 = vadd.f32 %v2495, %v2724
      %v2774 = vadd.f32 %v2496, %v2727
      %v2775 = vadd.f32 %v2497, %v2730
      %v2776 = vadd.f32 %v2498, %v2733
      %v2777 = vadd.f32 %v2499, %v2736
      %v2778 = vadd.f32 %v2500, %v2739
      %v2779 = vadd.f32 %v2501, %v2742
      %v2780 = vadd.f32 %v2502, %v2745
      %v2781 = vadd.f32 %v2503, %v2748
      %v2782 = vld [vmem:[%s2] sm:$0x1]
      %v2784 = vperm.slane %v2782, 0
      %v2786 = vadd.f32 %v2750, %v2784
      %v2787 = vadd.f32 %v2751, %v2784
      %v2788 = vadd.f32 %v2752, %v2784
      %v2789 = vadd.f32 %v2753, %v2784
      %v2790 = vadd.f32 %v2754, %v2784
      %v2791 = vadd.f32 %v2755, %v2784
      %v2792 = vadd.f32 %v2756, %v2784
      %v2793 = vadd.f32 %v2757, %v2784
      %v2794 = vadd.f32 %v2758, %v2784
      %v2795 = vadd.f32 %v2759, %v2784
      %v2796 = vadd.f32 %v2760, %v2784
      %v2797 = vadd.f32 %v2761, %v2784
      %v2798 = vadd.f32 %v2762, %v2784
      %v2799 = vadd.f32 %v2763, %v2784
      %v2800 = vadd.f32 %v2764, %v2784
      %v2801 = vadd.f32 %v2765, %v2784
      %v2802 = vadd.f32 %v2766, %v2784
      %v2803 = vadd.f32 %v2767, %v2784
      %v2804 = vadd.f32 %v2768, %v2784
      %v2805 = vadd.f32 %v2769, %v2784
      %v2806 = vadd.f32 %v2770, %v2784
      %v2807 = vadd.f32 %v2771, %v2784
      %v2808 = vadd.f32 %v2772, %v2784
      %v2809 = vadd.f32 %v2773, %v2784
      %v2810 = vadd.f32 %v2774, %v2784
      %v2811 = vadd.f32 %v2775, %v2784
      %v2812 = vadd.f32 %v2776, %v2784
      %v2813 = vadd.f32 %v2777, %v2784
      %v2814 = vadd.f32 %v2778, %v2784
      %v2815 = vadd.f32 %v2779, %v2784
      %v2816 = vadd.f32 %v2780, %v2784
      %v2817 = vadd.f32 %v2781, %v2784
      %v2818 = vadd.f32 %v2786, 3.0
      %v2819 = vadd.f32 %v2787, 3.0
      %v2820 = vadd.f32 %v2788, 3.0
      %v2821 = vadd.f32 %v2789, 3.0
      %v2822 = vadd.f32 %v2790, 3.0
      %v2823 = vadd.f32 %v2791, 3.0
      %v2824 = vadd.f32 %v2792, 3.0
      %v2825 = vadd.f32 %v2793, 3.0
      %v2826 = vadd.f32 %v2794, 3.0
      %v2827 = vadd.f32 %v2795, 3.0
      %v2828 = vadd.f32 %v2796, 3.0
      %v2829 = vadd.f32 %v2797, 3.0
      %v2830 = vadd.f32 %v2798, 3.0
      %v2831 = vadd.f32 %v2799, 3.0
      %v2832 = vadd.f32 %v2800, 3.0
      %v2833 = vadd.f32 %v2801, 3.0
      %v2834 = vadd.f32 %v2802, 3.0
      %v2835 = vadd.f32 %v2803, 3.0
      %v2836 = vadd.f32 %v2804, 3.0
      %v2837 = vadd.f32 %v2805, 3.0
      %v2838 = vadd.f32 %v2806, 3.0
      %v2839 = vadd.f32 %v2807, 3.0
      %v2840 = vadd.f32 %v2808, 3.0
      %v2841 = vadd.f32 %v2809, 3.0
      %v2842 = vadd.f32 %v2810, 3.0
      %v2843 = vadd.f32 %v2811, 3.0
      %v2844 = vadd.f32 %v2812, 3.0
      %v2845 = vadd.f32 %v2813, 3.0
      %v2846 = vadd.f32 %v2814, 3.0
      %v2847 = vadd.f32 %v2815, 3.0
      %v2848 = vadd.f32 %v2816, 3.0
      %v2849 = vadd.f32 %v2817, 3.0
      %v2850 = vmax.f32 %v2818, 0.0
      %v2851 = vmax.f32 %v2819, 0.0
      %v2852 = vmax.f32 %v2820, 0.0
      %v2853 = vmax.f32 %v2821, 0.0
      %v2854 = vmax.f32 %v2822, 0.0
      %v2855 = vmax.f32 %v2823, 0.0
      %v2856 = vmax.f32 %v2824, 0.0
      %v2857 = vmax.f32 %v2825, 0.0
      %v2858 = vmax.f32 %v2826, 0.0
      %v2859 = vmax.f32 %v2827, 0.0
      %v2860 = vmax.f32 %v2828, 0.0
      %v2861 = vmax.f32 %v2829, 0.0
      %v2862 = vmax.f32 %v2830, 0.0
      %v2863 = vmax.f32 %v2831, 0.0
      %v2864 = vmax.f32 %v2832, 0.0
      %v2865 = vmax.f32 %v2833, 0.0
      %v2866 = vmax.f32 %v2834, 0.0
      %v2867 = vmax.f32 %v2835, 0.0
      %v2868 = vmax.f32 %v2836, 0.0
      %v2869 = vmax.f32 %v2837, 0.0
      %v2870 = vmax.f32 %v2838, 0.0
      %v2871 = vmax.f32 %v2839, 0.0
      %v2872 = vmax.f32 %v2840, 0.0
      %v2873 = vmax.f32 %v2841, 0.0
      %v2874 = vmax.f32 %v2842, 0.0
      %v2875 = vmax.f32 %v2843, 0.0
      %v2876 = vmax.f32 %v2844, 0.0
      %v2877 = vmax.f32 %v2845, 0.0
      %v2878 = vmax.f32 %v2846, 0.0
      %v2879 = vmax.f32 %v2847, 0.0
      %v2880 = vmax.f32 %v2848, 0.0
      %v2881 = vmax.f32 %v2849, 0.0
      %v2882 = vmin.f32 %v2850, 6.0
      %v2883 = vmin.f32 %v2851, 6.0
      %v2884 = vmin.f32 %v2852, 6.0
      %v2885 = vmin.f32 %v2853, 6.0
      %v2886 = vmin.f32 %v2854, 6.0
      %v2887 = vmin.f32 %v2855, 6.0
      %v2888 = vmin.f32 %v2856, 6.0
      %v2889 = vmin.f32 %v2857, 6.0
      %v2890 = vmin.f32 %v2858, 6.0
      %v2891 = vmin.f32 %v2859, 6.0
      %v2892 = vmin.f32 %v2860, 6.0
      %v2893 = vmin.f32 %v2861, 6.0
      %v2894 = vmin.f32 %v2862, 6.0
      %v2895 = vmin.f32 %v2863, 6.0
      %v2896 = vmin.f32 %v2864, 6.0
      %v2897 = vmin.f32 %v2865, 6.0
      %v2898 = vmin.f32 %v2866, 6.0
      %v2899 = vmin.f32 %v2867, 6.0
      %v2900 = vmin.f32 %v2868, 6.0
      %v2901 = vmin.f32 %v2869, 6.0
      %v2902 = vmin.f32 %v2870, 6.0
      %v2903 = vmin.f32 %v2871, 6.0
      %v2904 = vmin.f32 %v2872, 6.0
      %v2905 = vmin.f32 %v2873, 6.0
      %v2906 = vmin.f32 %v2874, 6.0
      %v2907 = vmin.f32 %v2875, 6.0
      %v2908 = vmin.f32 %v2876, 6.0
      %v2909 = vmin.f32 %v2877, 6.0
      %v2910 = vmin.f32 %v2878, 6.0
      %v2911 = vmin.f32 %v2879, 6.0
      %v2912 = vmin.f32 %v2880, 6.0
      %v2913 = vmin.f32 %v2881, 6.0
      %v2914 = vmul.f32 %v2786, %v2882
      %v2915 = vmul.f32 %v2787, %v2883
      %v2916 = vmul.f32 %v2788, %v2884
      %v2917 = vmul.f32 %v2789, %v2885
      %v2918 = vmul.f32 %v2790, %v2886
      %v2919 = vmul.f32 %v2791, %v2887
      %v2920 = vmul.f32 %v2792, %v2888
      %v2921 = vmul.f32 %v2793, %v2889
      %v2922 = vmul.f32 %v2794, %v2890
      %v2923 = vmul.f32 %v2795, %v2891
      %v2924 = vmul.f32 %v2796, %v2892
      %v2925 = vmul.f32 %v2797, %v2893
      %v2926 = vmul.f32 %v2798, %v2894
      %v2927 = vmul.f32 %v2799, %v2895
      %v2928 = vmul.f32 %v2800, %v2896
      %v2929 = vmul.f32 %v2801, %v2897
      %v2930 = vmul.f32 %v2802, %v2898
      %v2931 = vmul.f32 %v2803, %v2899
      %v2932 = vmul.f32 %v2804, %v2900
      %v2933 = vmul.f32 %v2805, %v2901
      %v2934 = vmul.f32 %v2806, %v2902
      %v2935 = vmul.f32 %v2807, %v2903
      %v2936 = vmul.f32 %v2808, %v2904
      %v2937 = vmul.f32 %v2809, %v2905
      %v2938 = vmul.f32 %v2810, %v2906
      %v2939 = vmul.f32 %v2811, %v2907
      %v2940 = vmul.f32 %v2812, %v2908
      %v2941 = vmul.f32 %v2813, %v2909
      %v2942 = vmul.f32 %v2814, %v2910
      %v2943 = vmul.f32 %v2815, %v2911
      %v2944 = vmul.f32 %v2816, %v2912
      %v2945 = vmul.f32 %v2817, %v2913
      %v2946 = vmul.f32 %v2914, 0.16666667
      %v2947 = vmul.f32 %v2915, 0.16666667
      %v2948 = vmul.f32 %v2916, 0.16666667
      %v2949 = vmul.f32 %v2917, 0.16666667
      %v2950 = vmul.f32 %v2918, 0.16666667
      %v2951 = vmul.f32 %v2919, 0.16666667
      %v2952 = vmul.f32 %v2920, 0.16666667
      %v2953 = vmul.f32 %v2921, 0.16666667
      %v2954 = vmul.f32 %v2922, 0.16666667
      %v2955 = vmul.f32 %v2923, 0.16666667
      %v2956 = vmul.f32 %v2924, 0.16666667
      %v2957 = vmul.f32 %v2925, 0.16666667
      %v2958 = vmul.f32 %v2926, 0.16666667
      %v2959 = vmul.f32 %v2927, 0.16666667
      %v2960 = vmul.f32 %v2928, 0.16666667
      %v2961 = vmul.f32 %v2929, 0.16666667
      %v2962 = vmul.f32 %v2930, 0.16666667
      %v2963 = vmul.f32 %v2931, 0.16666667
      %v2964 = vmul.f32 %v2932, 0.16666667
      %v2965 = vmul.f32 %v2933, 0.16666667
      %v2966 = vmul.f32 %v2934, 0.16666667
      %v2967 = vmul.f32 %v2935, 0.16666667
      %v2968 = vmul.f32 %v2936, 0.16666667
      %v2969 = vmul.f32 %v2937, 0.16666667
      %v2970 = vmul.f32 %v2938, 0.16666667
      %v2971 = vmul.f32 %v2939, 0.16666667
      %v2972 = vmul.f32 %v2940, 0.16666667
      %v2973 = vmul.f32 %v2941, 0.16666667
      %v2974 = vmul.f32 %v2942, 0.16666667
      %v2975 = vmul.f32 %v2943, 0.16666667
      %v2976 = vmul.f32 %v2944, 0.16666667
      %v2977 = vmul.f32 %v2945, 0.16666667
      %vm2978 = vcmask 64512
      %2979 = vst.msk [vmem:[%s194] sm:$0xff] %vm2978, %v2946
      %2980 = vst.msk [vmem:[%s194 + $0x8] sm:$0xff] %vm2978, %v2947
      %2981 = vst.msk [vmem:[%s194 + $0x10] sm:$0xff] %vm2978, %v2948
      %2982 = vst.msk [vmem:[%s194 + $0x18] sm:$0xff] %vm2978, %v2949
      %2983 = vst.msk [vmem:[%s194 + $0x20] sm:$0xff] %vm2978, %v2950
      %2984 = vst.msk [vmem:[%s194 + $0x28] sm:$0xff] %vm2978, %v2951
      %2985 = vst.msk [vmem:[%s194 + $0x30] sm:$0xff] %vm2978, %v2952
      %2986 = vst.msk [vmem:[%s194 + $0x38] sm:$0xff] %vm2978, %v2953
      %2987 = vst.msk [vmem:[%s194 + $0x40] sm:$0xff] %vm2978, %v2954
      %2988 = vst.msk [vmem:[%s194 + $0x48] sm:$0xff] %vm2978, %v2955
      %2989 = vst.msk [vmem:[%s194 + $0x50] sm:$0xff] %vm2978, %v2956
      %2990 = vst.msk [vmem:[%s194 + $0x58] sm:$0xff] %vm2978, %v2957
      %2991 = vst.msk [vmem:[%s194 + $0x60] sm:$0xff] %vm2978, %v2958
      %2992 = vst.msk [vmem:[%s194 + $0x68] sm:$0xff] %vm2978, %v2959
      %2993 = vst.msk [vmem:[%s194 + $0x70] sm:$0xff] %vm2978, %v2960
      %2994 = vst.msk [vmem:[%s194 + $0x78] sm:$0xff] %vm2978, %v2961
      %2995 = vst.msk [vmem:[%s194 + $0x80] sm:$0xff] %vm2978, %v2962
      %2996 = vst.msk [vmem:[%s194 + $0x88] sm:$0xff] %vm2978, %v2963
      %2997 = vst.msk [vmem:[%s194 + $0x90] sm:$0xff] %vm2978, %v2964
      %2998 = vst.msk [vmem:[%s194 + $0x98] sm:$0xff] %vm2978, %v2965
      %2999 = vst.msk [vmem:[%s194 + $0xa0] sm:$0xff] %vm2978, %v2966
      %3000 = vst.msk [vmem:[%s194 + $0xa8] sm:$0xff] %vm2978, %v2967
      %3001 = vst.msk [vmem:[%s194 + $0xb0] sm:$0xff] %vm2978, %v2968
      %3002 = vst.msk [vmem:[%s194 + $0xb8] sm:$0xff] %vm2978, %v2969
      %3003 = vst.msk [vmem:[%s194 + $0xc0] sm:$0xff] %vm2978, %v2970
      %3004 = vst.msk [vmem:[%s194 + $0xc8] sm:$0xff] %vm2978, %v2971
      %3005 = vst.msk [vmem:[%s194 + $0xd0] sm:$0xff] %vm2978, %v2972
      %3006 = vst.msk [vmem:[%s194 + $0xd8] sm:$0xff] %vm2978, %v2973
      %3007 = vst.msk [vmem:[%s194 + $0xe0] sm:$0xff] %vm2978, %v2974
      %3008 = vst.msk [vmem:[%s194 + $0xe8] sm:$0xff] %vm2978, %v2975
      %3009 = vst.msk [vmem:[%s194 + $0xf0] sm:$0xff] %vm2978, %v2976
      %3010 = vst.msk [vmem:[%s194 + $0xf8] sm:$0xff] %vm2978, %v2977
      %s3011 = smul.u32 16, %s19
      %p3012 = scmp.lt.s32.totalorder %s18, 1
      %s3013 = scalar_select %p3012, %s18, 1
      %p3014 = scmp.lt.s32.totalorder %s3011, 15
      %s3015 = scalar_select %p3014, %s3011, 15
      %s3016 = smul.addr %s3015, 2
      %s3017 = smul.addr %s3013, 32
      %s3018 = sadd.s32 %s3016, %s3017
      %s3019 = smul.addr %s3018, 8
      %s3020 = scalar_lea.vmem %s3, %s3019
      // Predicated region
      $region41: #{tpu_custom_call.1} parent=31 // pred_check
        %p3021 = pneg %p114
      $region42: #{tpu_custom_call.1} parent=31 // pred_check_branch
        %3023 = sbr.rel (%p3021) target = $region44
      $region43: #{tpu_custom_call.1} parent=31 // pred_region
        %s3024 = smul.u32 16, %s19
      $region44: #{tpu_custom_call.1} parent=31 // pred_fallthru
        _
    $region32: #{tpu_custom_call.1} parent=5 // pred_fallthru
      _
    %p3025 = scmp.le.s32.totalorder 2, %s9
    // Predicated region
    $region45: #{tpu_custom_call.1} parent=5 // pred_check
      %p3026 = pneg %p3025
    $region46: #{tpu_custom_call.1} parent=5 // pred_check_branch
      %3028 = sbr.rel (%p3026) target = $region48
    $region47: #{tpu_custom_call.1} parent=5 // pred_region
      %s3029 = ssub.s32 %s9, 2
      // Predicated region
      $region49: #{tpu_custom_call.1} parent=47 // pred_check
        %p3030 = pneg %p120
      $region50: #{tpu_custom_call.1} parent=47 // pred_check_branch
        %3032 = sbr.rel (%p3030) target = $region52
      $region51: #{tpu_custom_call.1} parent=47 // pred_region
        %s3033 = smul.u32 16, %s21
        %p3034 = scmp.lt.s32.totalorder %s20, 1
        %s3035 = scalar_select %p3034, %s20, 1
        %p3036 = scmp.lt.s32.totalorder %s3033, 15
        %s3037 = scalar_select %p3036, %s3033, 15
        %s3038 = smul.addr %s3037, 2
        %s3039 = smul.addr %s3035, 32
        %s3040 = sadd.s32 %s3038, %s3039
        %s3041 = smul.addr %s3040, 8
        %s3042 = scalar_lea.vmem %s3, %s3041
      $region52: #{tpu_custom_call.1} parent=47 // pred_fallthru
        _
    $region48: #{tpu_custom_call.1} parent=5 // pred_fallthru
      _
  $region6: #{tpu_custom_call.1} parent=0 // loop_footer
    %s13 = sadd.s32 1, %s9
  $region7: #{tpu_custom_call.1} parent=0 // loop_footer_branch
    %8 = sbr.rel target = $region3
  $region8: #{tpu_custom_call.1} parent=0 // loop_exit
    _

</llo_original>
